<compile_context>
chip_gen: v7x
topology: tpu7x:2x2x1
jax: 0.10.0
libtpu: 0.0.40
codegen_flags: <defaults>
</compile_context>

<pallas_src>
import functools

import jax
import jax.numpy as jnp
from jax.experimental import pallas as pl
from jax.experimental.pallas import tpu as pltpu

LANES = 128
CONV_K = 5          # Net_CNN hardcodes 5x5 kernels
OC1, OC2 = 6, 16    # Net_CNN hardcodes 6 and 16 conv channels
FC1_OUT, FC2_OUT = 120, 84


def _round_up(n, m):
    return ((n + m - 1) // m) * m


# --------------------------------------------------------------------------- #
# Pallas kernels
# --------------------------------------------------------------------------- #
def _dense_kernel(x_ref, w_ref, b_ref, o_ref, *, apply_relu):
    """One tile of  relu(X @ W + b).  X/W bf16, accumulate f32, lane-dense out."""
    acc = jnp.dot(x_ref[...], w_ref[...], preferred_element_type=jnp.float32)
    acc = acc + b_ref[...]                      # (1, Np) broadcast over rows
    if apply_relu:
        acc = jnp.maximum(acc, 0.0)
    o_ref[...] = acc


def _fc_head_kernel(x_ref, w1_ref, b1_ref, w2_ref, b2_ref, w3_ref, b3_ref, o_ref):
    """Fused fc1->relu->fc2->relu->fc3 (raw logits, no final nonlinearity)."""
    h = jnp.dot(x_ref[...], w1_ref[...], preferred_element_type=jnp.float32) + b1_ref[...]
    h = jnp.maximum(h, 0.0)
    h = jnp.dot(h.astype(jnp.bfloat16), w2_ref[...],
                preferred_element_type=jnp.float32) + b2_ref[...]
    h = jnp.maximum(h, 0.0)
    h = jnp.dot(h.astype(jnp.bfloat16), w3_ref[...],
                preferred_element_type=jnp.float32) + b3_ref[...]
    o_ref[...] = h                               # logits (padded lanes sliced by caller)


# --------------------------------------------------------------------------- #
# Pallas wrappers
# --------------------------------------------------------------------------- #
def _dense_pallas(x2d, w_pad, b_pad, *, apply_relu, out_cols):
    """y[:R, :out_cols] of relu(x2d @ W + b), run lane-dense / bf16 on the MXU."""
    R, K = x2d.shape
    Kp, Np = w_pad.shape
    tile = min(256, _round_up(R, 8))
    Rp = _round_up(R, tile)

    xp = jnp.zeros((Rp, Kp), jnp.bfloat16).at[:R, :K].set(x2d.astype(jnp.bfloat16))

    flops = 2 * Rp * Kp * Np
    bytes_accessed = int(xp.size * 2 + w_pad.size * 2 + b_pad.size * 4 + Rp * Np * 4)

    out = pl.pallas_call(
        functools.partial(_dense_kernel, apply_relu=apply_relu),
        out_shape=jax.ShapeDtypeStruct((Rp, Np), jnp.float32),
        grid=(Rp // tile,),
        in_specs=[
            pl.BlockSpec((tile, Kp), lambda i: (i, 0)),   # activation tiles stream
            pl.BlockSpec((Kp, Np), lambda i: (0, 0)),     # weights VMEM-resident
            pl.BlockSpec((1, Np), lambda i: (0, 0)),      # bias VMEM-resident
        ],
        out_specs=pl.BlockSpec((tile, Np), lambda i: (i, 0)),
        compiler_params=pltpu.CompilerParams(dimension_semantics=("parallel",)),
        cost_estimate=pl.CostEstimate(flops=int(flops), transcendentals=0,
                                      bytes_accessed=bytes_accessed),
    )(xp, w_pad, b_pad)
    return out[:R, :out_cols]


def _fc_head_pallas(x2d, w1p, b1p, w2p, b2p, w3p, b3p, num_classes):
    """Fused classifier head; batch gridded (tile<=256), weights resident."""
    B, K = x2d.shape
    K1p = w1p.shape[0]
    Np = w3p.shape[1]
    tile_b = min(256, _round_up(B, 8))
    Bp = _round_up(B, tile_b)

    xp = jnp.zeros((Bp, K1p), jnp.bfloat16).at[:B, :K].set(x2d.astype(jnp.bfloat16))

    flops = 2 * Bp * (w1p.shape[0] * w1p.shape[1] +
                      w2p.shape[0] * w2p.shape[1] +
                      w3p.shape[0] * w3p.shape[1])
    bytes_accessed = int((xp.size + w1p.size + w2p.size + w3p.size) * 2 +
                         (b1p.size + b2p.size + b3p.size) * 4 + Bp * Np * 4)

    out = pl.pallas_call(
        _fc_head_kernel,
        out_shape=jax.ShapeDtypeStruct((Bp, Np), jnp.float32),
        grid=(Bp // tile_b,),
        in_specs=[
            pl.BlockSpec((tile_b, K1p), lambda i: (i, 0)),
            pl.BlockSpec(w1p.shape, lambda i: (0, 0)),
            pl.BlockSpec(b1p.shape, lambda i: (0, 0)),
            pl.BlockSpec(w2p.shape, lambda i: (0, 0)),
            pl.BlockSpec(b2p.shape, lambda i: (0, 0)),
            pl.BlockSpec(w3p.shape, lambda i: (0, 0)),
            pl.BlockSpec(b3p.shape, lambda i: (0, 0)),
        ],
        out_specs=pl.BlockSpec((tile_b, Np), lambda i: (i, 0)),
        compiler_params=pltpu.CompilerParams(dimension_semantics=("parallel",)),
        cost_estimate=pl.CostEstimate(flops=int(flops), transcendentals=0,
                                      bytes_accessed=bytes_accessed),
    )(xp, w1p, b1p, w2p, b2p, w3p, b3p)
    return out[:B, :num_classes]


# --------------------------------------------------------------------------- #
# XLA layout glue (no FLOPs): im2col, max-pool, NCHW<->NHWC
# --------------------------------------------------------------------------- #
def _im2col_nchw(x, k):
    """x: (B, C, H, W) -> (B*Ho*Wo, C*k*k), column order = (c, dy, dx)."""
    B, C, H, W = x.shape
    Ho, Wo = H - k + 1, W - k + 1
    cols = []
    for dy in range(k):
        for dx in range(k):
            cols.append(x[:, :, dy:dy + Ho, dx:dx + Wo])   # (B, C, Ho, Wo)
    p = jnp.stack(cols, axis=2)                            # (B, C, k*k, Ho, Wo)
    p = p.reshape(B, C * k * k, Ho, Wo)
    p = jnp.transpose(p, (0, 2, 3, 1))                     # (B, Ho, Wo, C*k*k)
    return p.reshape(B * Ho * Wo, C * k * k)


def _maxpool2x2_nhwc(x):
    B, H, W, C = x.shape
    return x.reshape(B, H // 2, 2, W // 2, 2, C).max(axis=(2, 4))


def _maxpool2x2_nchw(x):
    B, C, H, W = x.shape
    return x.reshape(B, C, H // 2, 2, W // 2, 2).max(axis=(3, 5))


# --------------------------------------------------------------------------- #
# Parameter preparation (PyTorch layout -> padded, lane-dense, bf16 matmul form)
# --------------------------------------------------------------------------- #
def prepare_params(raw):
    def pad_mat(w2d):                      # (K, N) -> (round128(K), round128(N)) bf16
        K, N = w2d.shape
        Kp, Np = _round_up(K, LANES), _round_up(N, LANES)
        out = jnp.zeros((Kp, Np), jnp.bfloat16)
        return out.at[:K, :N].set(w2d.astype(jnp.bfloat16))

    def pad_bias(b):                       # (N,) -> (1, round128(N)) f32
        N = b.shape[0]
        out = jnp.zeros((1, _round_up(N, LANES)), jnp.float32)
        return out.at[0, :N].set(b.astype(jnp.float32))

    oc1, ic1, k, _ = raw["conv1_w"].shape
    oc2, ic2, _, _ = raw["conv2_w"].shape
    w1col = raw["conv1_w"].reshape(oc1, ic1 * k * k).T       # (Cin*25, 6)
    w2col = raw["conv2_w"].reshape(oc2, ic2 * k * k).T       # (6*25, 16)
    return {
        "w1": pad_mat(w1col), "b1": pad_bias(raw["conv1_b"]),
        "w2": pad_mat(w2col), "b2": pad_bias(raw["conv2_b"]),
        "fc1_w": pad_mat(raw["fc1_w"].T), "fc1_b": pad_bias(raw["fc1_b"]),
        "fc2_w": pad_mat(raw["fc2_w"].T), "fc2_b": pad_bias(raw["fc2_b"]),
        "fc3_w": pad_mat(raw["fc3_w"].T), "fc3_b": pad_bias(raw["fc3_b"]),
    }


# --------------------------------------------------------------------------- #
# Net_CNN forward (2-D / Conv2d branch)
# --------------------------------------------------------------------------- #
def net_cnn_forward(x, params, num_classes):
    B, Cin, H, W = x.shape
    k = CONV_K

    # conv1 -> relu   (im2col + Pallas matmul), then maxpool 2x2
    H1, W1 = H - k + 1, W - k + 1
    p1 = _im2col_nchw(x, k)                                            # (B*H1*W1, Cin*25)
    y1 = _dense_pallas(p1, params["w1"], params["b1"], apply_relu=True, out_cols=OC1)
    y1 = _maxpool2x2_nhwc(y1.reshape(B, H1, W1, OC1))                  # (B, H1/2, W1/2, 6)

    # conv2 -> relu, then maxpool 2x2
    x2 = jnp.transpose(y1, (0, 3, 1, 2))                               # NCHW
    H2, W2 = y1.shape[1] - k + 1, y1.shape[2] - k + 1
    p2 = _im2col_nchw(x2, k)                                           # (B*H2*W2, 6*25)
    y2 = _dense_pallas(p2, params["w2"], params["b2"], apply_relu=True, out_cols=OC2)
    y2 = _maxpool2x2_nhwc(y2.reshape(B, H2, W2, OC2))                  # (B, H2/2, W2/2, 16)

    # flatten in PyTorch NCHW order: x.view(-1, 16 * odim**2)
    flat = jnp.transpose(y2, (0, 3, 1, 2)).reshape(B, -1)              # (B, 16*odim^2)

    # fused fc1(relu) -> fc2(relu) -> fc3 (raw logits)
    return _fc_head_pallas(flat, params["fc1_w"], params["fc1_b"],
                           params["fc2_w"], params["fc2_b"],
                           params["fc3_w"], params["fc3_b"], num_classes)


# --------------------------------------------------------------------------- #
# Pure-JAX f32 reference (independent path: direct convolution, NCHW)
# --------------------------------------------------------------------------- #
def _reference_forward(x, raw):
    def conv(h, w, b):
        y = jax.lax.conv_general_dilated(h, w, (1, 1), "VALID",
                                         dimension_numbers=("NCHW", "OIHW", "NCHW"))
        return y + b.reshape(1, -1, 1, 1)

    h = _maxpool2x2_nchw(jnp.maximum(conv(x, raw["conv1_w"], raw["conv1_b"]), 0.0))
    h = _maxpool2x2_nchw(jnp.maximum(conv(h, raw["conv2_w"], raw["conv2_b"]), 0.0))
    h = h.reshape(h.shape[0], -1)
    h = jnp.maximum(h @ raw["fc1_w"].T + raw["fc1_b"], 0.0)
    h = jnp.maximum(h @ raw["fc2_w"].T + raw["fc2_b"], 0.0)
    return h @ raw["fc3_w"].T + raw["fc3_b"]


def _init_uniform(key, shape, fan_in):
    bound = 1.0 / jnp.sqrt(float(fan_in))
    return jax.random.uniform(key, shape, jnp.float32, -bound, bound)


if __name__ == "__main__":
    # CIFAR-like config: 3 input channels, 32x32 spatial, 10 classes, batch 2.
    B, CIN, DIM, NUM_CLASSES = 2, 3, 32, 10
    odim = ((DIM - 4) // 2 - 4) // 2          # = 5
    fc_in = OC2 * odim * odim                 # = 400

    key = jax.random.PRNGKey(0)
    kx, k1, k1b, k2, k2b, k3, k3b, k4, k4b, k5, k5b = jax.random.split(key, 11)

    raw = {
        "conv1_w": _init_uniform(k1, (OC1, CIN, CONV_K, CONV_K), CIN * CONV_K * CONV_K),
        "conv1_b": _init_uniform(k1b, (OC1,), CIN * CONV_K * CONV_K),
        "conv2_w": _init_uniform(k2, (OC2, OC1, CONV_K, CONV_K), OC1 * CONV_K * CONV_K),
        "conv2_b": _init_uniform(k2b, (OC2,), OC1 * CONV_K * CONV_K),
        "fc1_w": _init_uniform(k3, (FC1_OUT, fc_in), fc_in),
        "fc1_b": _init_uniform(k3b, (FC1_OUT,), fc_in),
        "fc2_w": _init_uniform(k4, (FC2_OUT, FC1_OUT), FC1_OUT),
        "fc2_b": _init_uniform(k4b, (FC2_OUT,), FC1_OUT),
        "fc3_w": _init_uniform(k5, (NUM_CLASSES, FC2_OUT), FC2_OUT),
        "fc3_b": _init_uniform(k5b, (NUM_CLASSES,), FC2_OUT),
    }
    params = prepare_params(raw)

    x = jax.random.normal(kx, (B, CIN, DIM, DIM), jnp.float32)

    fwd = jax.jit(net_cnn_forward, static_argnums=2)
    out = jax.block_until_ready(fwd(x, params, NUM_CLASSES))

    ref = _reference_forward(x, raw)
    assert out.shape == (B, NUM_CLASSES), out.shape
    assert jnp.allclose(out, ref, atol=5e-2, rtol=5e-2), (
        "mismatch vs JAX reference: max |diff| = %g" % float(jnp.max(jnp.abs(out - ref))))

    print("KERNEL_OK")
</pallas_src>

<mosaic_0001>
module attributes {stable_mosaic.version = 11 : i64} {
  func.func @_dense_kernel(%arg0: i32, %arg1: memref<256x128xbf16, #tpu.memory_space<vmem>>, %arg2: memref<128x128xbf16, #tpu.memory_space<vmem>>, %arg3: memref<1x128xf32, #tpu.memory_space<vmem>>, %arg4: memref<256x128xf32, #tpu.memory_space<vmem>>) attributes {dimension_semantics = [#tpu.dimension_semantics<parallel>], iteration_bounds = array<i64: 7>, scalar_prefetch = 0 : i64, scratch_operands = 0 : i64, tpu.core_type = #tpu.core_type<tc>, window_params = [{transform_indices = @transform_0, window_bounds = array<i64: 256, 128>}, {pipeline_mode = #tpu.pipeline_mode<synchronous>, transform_indices = @transform_1, window_bounds = array<i64: 128, 128>}, {pipeline_mode = #tpu.pipeline_mode<synchronous>, transform_indices = @transform_2, window_bounds = array<i64: 1, 128>}, {transform_indices = @transform_3, window_bounds = array<i64: 256, 128>}]} {
    %c0 = arith.constant 0 : index
    %c0_0 = arith.constant 0 : index
    %0 = vector.load %arg1[%c0, %c0_0] : memref<256x128xbf16, #tpu.memory_space<vmem>>, vector<256x128xbf16>
    %c0_1 = arith.constant 0 : index
    %c0_2 = arith.constant 0 : index
    %1 = vector.load %arg2[%c0_1, %c0_2] : memref<128x128xbf16, #tpu.memory_space<vmem>>, vector<128x128xbf16>
    %cst = arith.constant dense<0.000000e+00> : vector<256x128xf32>
    %2 = tpu.matmul %0, %1, %cst {dimension_numbers = #tpu.dot_dimension_numbers<[1], [0], [0], [1], [0, 0, 1, 1], [], []>} : vector<256x128xbf16>, vector<128x128xbf16>, vector<256x128xf32> -> vector<256x128xf32>
    %c0_3 = arith.constant 0 : index
    %c0_4 = arith.constant 0 : index
    %3 = vector.load %arg3[%c0_3, %c0_4] : memref<1x128xf32, #tpu.memory_space<vmem>>, vector<1x128xf32>
    %4 = vector.broadcast %3 : vector<1x128xf32> to vector<256x128xf32>
    %5 = arith.addf %2, %4 : vector<256x128xf32>
    %cst_5 = arith.constant 0.000000e+00 : f32
    %6 = vector.broadcast %cst_5 : f32 to vector<256x128xf32>
    %7 = arith.maximumf %5, %6 : vector<256x128xf32>
    %c0_6 = arith.constant 0 : index
    %c0_7 = arith.constant 0 : index
    %8 = vector.load %arg4[%c0_6, %c0_7] : memref<256x128xf32, #tpu.memory_space<vmem>>, vector<256x128xf32>
    tpu.vector_store %arg4[%c0_6, %c0_7], %7 {strides = array<i32>} : memref<256x128xf32, #tpu.memory_space<vmem>>, vector<256x128xf32>,
    return
  }
  func.func @transform_0(%arg0: i32) -> (i32, i32) {
    %c0_i32 = arith.constant 0 : i32
    %c0_i32_0 = arith.constant 0 : i32
    return %arg0, %c0_i32 : i32, i32
  }
  func.func @transform_1(%arg0: i32) -> (i32, i32) {
    %c0_i32 = arith.constant 0 : i32
    %c0_i32_0 = arith.constant 0 : i32
    %c0_i32_1 = arith.constant 0 : i32
    return %c0_i32, %c0_i32_0 : i32, i32
  }
  func.func @transform_2(%arg0: i32) -> (i32, i32) {
    %c0_i32 = arith.constant 0 : i32
    %c0_i32_0 = arith.constant 0 : i32
    %c0_i32_1 = arith.constant 0 : i32
    return %c0_i32, %c0_i32_0 : i32, i32
  }
  func.func @transform_3(%arg0: i32) -> (i32, i32) {
    %c0_i32 = arith.constant 0 : i32
    %c0_i32_0 = arith.constant 0 : i32
    return %arg0, %c0_i32 : i32, i32
  }
}

module attributes {stable_mosaic.version = 11 : i64} {
  func.func @_dense_kernel(%arg0: i32, %arg1: memref<200x256xbf16, #tpu.memory_space<vmem>>, %arg2: memref<256x128xbf16, #tpu.memory_space<vmem>>, %arg3: memref<1x128xf32, #tpu.memory_space<vmem>>, %arg4: memref<200x128xf32, #tpu.memory_space<vmem>>) attributes {dimension_semantics = [#tpu.dimension_semantics<parallel>], iteration_bounds = array<i64: 1>, scalar_prefetch = 0 : i64, scratch_operands = 0 : i64, tpu.core_type = #tpu.core_type<tc>, window_params = [{transform_indices = @transform_0, window_bounds = array<i64: 200, 256>}, {pipeline_mode = #tpu.pipeline_mode<synchronous>, transform_indices = @transform_1, window_bounds = array<i64: 256, 128>}, {pipeline_mode = #tpu.pipeline_mode<synchronous>, transform_indices = @transform_2, window_bounds = array<i64: 1, 128>}, {transform_indices = @transform_3, window_bounds = array<i64: 200, 128>}]} {
    %c0 = arith.constant 0 : index
    %c0_0 = arith.constant 0 : index
    %0 = vector.load %arg1[%c0, %c0_0] : memref<200x256xbf16, #tpu.memory_space<vmem>>, vector<200x256xbf16>
    %c0_1 = arith.constant 0 : index
    %c0_2 = arith.constant 0 : index
    %1 = vector.load %arg2[%c0_1, %c0_2] : memref<256x128xbf16, #tpu.memory_space<vmem>>, vector<256x128xbf16>
    %cst = arith.constant dense<0.000000e+00> : vector<200x128xf32>
    %2 = tpu.matmul %0, %1, %cst {dimension_numbers = #tpu.dot_dimension_numbers<[1], [0], [0], [1], [0, 0, 1, 1], [], []>} : vector<200x256xbf16>, vector<256x128xbf16>, vector<200x128xf32> -> vector<200x128xf32>
    %c0_3 = arith.constant 0 : index
    %c0_4 = arith.constant 0 : index
    %3 = vector.load %arg3[%c0_3, %c0_4] : memref<1x128xf32, #tpu.memory_space<vmem>>, vector<1x128xf32>
    %4 = vector.broadcast %3 : vector<1x128xf32> to vector<200x128xf32>
    %5 = arith.addf %2, %4 : vector<200x128xf32>
    %cst_5 = arith.constant 0.000000e+00 : f32
    %6 = vector.broadcast %cst_5 : f32 to vector<200x128xf32>
    %7 = arith.maximumf %5, %6 : vector<200x128xf32>
    %c0_6 = arith.constant 0 : index
    %c0_7 = arith.constant 0 : index
    %8 = vector.load %arg4[%c0_6, %c0_7] : memref<200x128xf32, #tpu.memory_space<vmem>>, vector<200x128xf32>
    tpu.vector_store %arg4[%c0_6, %c0_7], %7 {strides = array<i32>} : memref<200x128xf32, #tpu.memory_space<vmem>>, vector<200x128xf32>,
    return
  }
  func.func @transform_0(%arg0: i32) -> (i32, i32) {
    %c0_i32 = arith.constant 0 : i32
    %c0_i32_0 = arith.constant 0 : i32
    return %arg0, %c0_i32 : i32, i32
  }
  func.func @transform_1(%arg0: i32) -> (i32, i32) {
    %c0_i32 = arith.constant 0 : i32
    %c0_i32_0 = arith.constant 0 : i32
    %c0_i32_1 = arith.constant 0 : i32
    return %c0_i32, %c0_i32_0 : i32, i32
  }
  func.func @transform_2(%arg0: i32) -> (i32, i32) {
    %c0_i32 = arith.constant 0 : i32
    %c0_i32_0 = arith.constant 0 : i32
    %c0_i32_1 = arith.constant 0 : i32
    return %c0_i32, %c0_i32_0 : i32, i32
  }
  func.func @transform_3(%arg0: i32) -> (i32, i32) {
    %c0_i32 = arith.constant 0 : i32
    %c0_i32_0 = arith.constant 0 : i32
    return %arg0, %c0_i32 : i32, i32
  }
}

module attributes {stable_mosaic.version = 11 : i64} {
  func.func @_fc_head_kernel(%arg0: i32, %arg1: memref<8x512xbf16, #tpu.memory_space<vmem>>, %arg2: memref<512x128xbf16, #tpu.memory_space<vmem>>, %arg3: memref<1x128xf32, #tpu.memory_space<vmem>>, %arg4: memref<128x128xbf16, #tpu.memory_space<vmem>>, %arg5: memref<1x128xf32, #tpu.memory_space<vmem>>, %arg6: memref<128x128xbf16, #tpu.memory_space<vmem>>, %arg7: memref<1x128xf32, #tpu.memory_space<vmem>>, %arg8: memref<8x128xf32, #tpu.memory_space<vmem>>) attributes {dimension_semantics = [#tpu.dimension_semantics<parallel>], iteration_bounds = array<i64: 1>, scalar_prefetch = 0 : i64, scratch_operands = 0 : i64, tpu.core_type = #tpu.core_type<tc>, window_params = [{transform_indices = @transform_0, window_bounds = array<i64: 8, 512>}, {pipeline_mode = #tpu.pipeline_mode<synchronous>, transform_indices = @transform_1, window_bounds = array<i64: 512, 128>}, {pipeline_mode = #tpu.pipeline_mode<synchronous>, transform_indices = @transform_2, window_bounds = array<i64: 1, 128>}, {pipeline_mode = #tpu.pipeline_mode<synchronous>, transform_indices = @transform_3, window_bounds = array<i64: 128, 128>}, {pipeline_mode = #tpu.pipeline_mode<synchronous>, transform_indices = @transform_4, window_bounds = array<i64: 1, 128>}, {pipeline_mode = #tpu.pipeline_mode<synchronous>, transform_indices = @transform_5, window_bounds = array<i64: 128, 128>}, {pipeline_mode = #tpu.pipeline_mode<synchronous>, transform_indices = @transform_6, window_bounds = array<i64: 1, 128>}, {transform_indices = @transform_7, window_bounds = array<i64: 8, 128>}]} {
    %c0 = arith.constant 0 : index
    %c0_0 = arith.constant 0 : index
    %0 = vector.load %arg1[%c0, %c0_0] : memref<8x512xbf16, #tpu.memory_space<vmem>>, vector<8x512xbf16>
    %c0_1 = arith.constant 0 : index
    %c0_2 = arith.constant 0 : index
    %1 = vector.load %arg2[%c0_1, %c0_2] : memref<512x128xbf16, #tpu.memory_space<vmem>>, vector<512x128xbf16>
    %cst = arith.constant dense<0.000000e+00> : vector<8x128xf32>
    %2 = tpu.matmul %0, %1, %cst {dimension_numbers = #tpu.dot_dimension_numbers<[1], [0], [0], [1], [0, 0, 1, 1], [], []>} : vector<8x512xbf16>, vector<512x128xbf16>, vector<8x128xf32> -> vector<8x128xf32>
    %c0_3 = arith.constant 0 : index
    %c0_4 = arith.constant 0 : index
    %3 = vector.load %arg3[%c0_3, %c0_4] : memref<1x128xf32, #tpu.memory_space<vmem>>, vector<1x128xf32>
    %4 = vector.broadcast %3 : vector<1x128xf32> to vector<8x128xf32>
    %5 = arith.addf %2, %4 : vector<8x128xf32>
    %cst_5 = arith.constant 0.000000e+00 : f32
    %6 = vector.broadcast %cst_5 : f32 to vector<8x128xf32>
    %7 = arith.maximumf %5, %6 : vector<8x128xf32>
    %8 = arith.truncf %7 : vector<8x128xf32> to vector<8x128xbf16>
    %c0_6 = arith.constant 0 : index
    %c0_7 = arith.constant 0 : index
    %9 = vector.load %arg4[%c0_6, %c0_7] : memref<128x128xbf16, #tpu.memory_space<vmem>>, vector<128x128xbf16>
    %cst_8 = arith.constant dense<0.000000e+00> : vector<8x128xf32>
    %10 = tpu.matmul %8, %9, %cst_8 {dimension_numbers = #tpu.dot_dimension_numbers<[1], [0], [0], [1], [0, 0, 1, 1], [], []>} : vector<8x128xbf16>, vector<128x128xbf16>, vector<8x128xf32> -> vector<8x128xf32>
    %c0_9 = arith.constant 0 : index
    %c0_10 = arith.constant 0 : index
    %11 = vector.load %arg5[%c0_9, %c0_10] : memref<1x128xf32, #tpu.memory_space<vmem>>, vector<1x128xf32>
    %12 = vector.broadcast %11 : vector<1x128xf32> to vector<8x128xf32>
    %13 = arith.addf %10, %12 : vector<8x128xf32>
    %cst_11 = arith.constant 0.000000e+00 : f32
    %14 = vector.broadcast %cst_11 : f32 to vector<8x128xf32>
    %15 = arith.maximumf %13, %14 : vector<8x128xf32>
    %16 = arith.truncf %15 : vector<8x128xf32> to vector<8x128xbf16>
    %c0_12 = arith.constant 0 : index
    %c0_13 = arith.constant 0 : index
    %17 = vector.load %arg6[%c0_12, %c0_13] : memref<128x128xbf16, #tpu.memory_space<vmem>>, vector<128x128xbf16>
    %cst_14 = arith.constant dense<0.000000e+00> : vector<8x128xf32>
    %18 = tpu.matmul %16, %17, %cst_14 {dimension_numbers = #tpu.dot_dimension_numbers<[1], [0], [0], [1], [0, 0, 1, 1], [], []>} : vector<8x128xbf16>, vector<128x128xbf16>, vector<8x128xf32> -> vector<8x128xf32>
    %c0_15 = arith.constant 0 : index
    %c0_16 = arith.constant 0 : index
    %19 = vector.load %arg7[%c0_15, %c0_16] : memref<1x128xf32, #tpu.memory_space<vmem>>, vector<1x128xf32>
    %20 = vector.broadcast %19 : vector<1x128xf32> to vector<8x128xf32>
    %21 = arith.addf %18, %20 : vector<8x128xf32>
    %c0_17 = arith.constant 0 : index
    %c0_18 = arith.constant 0 : index
    %22 = vector.load %arg8[%c0_17, %c0_18] : memref<8x128xf32, #tpu.memory_space<vmem>>, vector<8x128xf32>
    tpu.vector_store %arg8[%c0_17, %c0_18], %21 {strides = array<i32>} : memref<8x128xf32, #tpu.memory_space<vmem>>, vector<8x128xf32>,
    return
  }
  func.func @transform_0(%arg0: i32) -> (i32, i32) {
    %c0_i32 = arith.constant 0 : i32
    %c0_i32_0 = arith.constant 0 : i32
    return %arg0, %c0_i32 : i32, i32
  }
  func.func @transform_1(%arg0: i32) -> (i32, i32) {
    %c0_i32 = arith.constant 0 : i32
    %c0_i32_0 = arith.constant 0 : i32
    %c0_i32_1 = arith.constant 0 : i32
    return %c0_i32, %c0_i32_0 : i32, i32
  }
  func.func @transform_2(%arg0: i32) -> (i32, i32) {
    %c0_i32 = arith.constant 0 : i32
    %c0_i32_0 = arith.constant 0 : i32
    %c0_i32_1 = arith.constant 0 : i32
    return %c0_i32, %c0_i32_0 : i32, i32
  }
  func.func @transform_3(%arg0: i32) -> (i32, i32) {
    %c0_i32 = arith.constant 0 : i32
    %c0_i32_0 = arith.constant 0 : i32
    %c0_i32_1 = arith.constant 0 : i32
    return %c0_i32, %c0_i32_0 : i32, i32
  }
  func.func @transform_4(%arg0: i32) -> (i32, i32) {
    %c0_i32 = arith.constant 0 : i32
    %c0_i32_0 = arith.constant 0 : i32
    %c0_i32_1 = arith.constant 0 : i32
    return %c0_i32, %c0_i32_0 : i32, i32
  }
  func.func @transform_5(%arg0: i32) -> (i32, i32) {
    %c0_i32 = arith.constant 0 : i32
    %c0_i32_0 = arith.constant 0 : i32
    %c0_i32_1 = arith.constant 0 : i32
    return %c0_i32, %c0_i32_0 : i32, i32
  }
  func.func @transform_6(%arg0: i32) -> (i32, i32) {
    %c0_i32 = arith.constant 0 : i32
    %c0_i32_0 = arith.constant 0 : i32
    %c0_i32_1 = arith.constant 0 : i32
    return %c0_i32, %c0_i32_0 : i32, i32
  }
  func.func @transform_7(%arg0: i32) -> (i32, i32) {
    %c0_i32 = arith.constant 0 : i32
    %c0_i32_0 = arith.constant 0 : i32
    return %arg0, %c0_i32 : i32, i32
  }
}

</mosaic_0001>

<llo_original>
// kernel: net_cnn_forward.3
$region0: #{net_cnn_forward.3}
  #allocation0 [shape = 'u32[]', space=smem, size = 0x4, offset = 0x4, fixed_abs, tag = 'smem constant byte address 0x4 - core index']
  #allocation1 [shape = 'u32[144,128]{1,0:T(1,128)}', space=vmem, size = 0x12000, scoped, tag = 'internal scratch']
  %s0 = inlined_call_operand.vmem [shape: bf16[1792,128], index: 0, kind: input, shape index: {}]
  %s1 = inlined_call_operand.vmem [shape: bf16[128,128], index: 1, kind: input, shape index: {}]
  %s2 = inlined_call_operand.vmem [shape: f32[1,128], index: 2, kind: input, shape index: {}]
  %s3 = inlined_call_operand.vmem [shape: f32[1792,128], index: 3, kind: output, shape index: {}]
  %s4 = sld [smem:[#allocation0]]
  $region45: #{net_cnn_forward.3} parent=0
    _
  %s6 = ssub.s32 1, %s4
  %s7 = scalar_select 0, %s6, %s4
  loop: start=0, step=1, limit=9
  $region2: #{net_cnn_forward.3} parent=0 // loop_pre_header
    _
  $region3: #{net_cnn_forward.3} parent=0 // loop_header
    %s9 = sphi 0, %s13
    %p10 = scmp.ge.s32.totalorder %s9, 9
    %s19 = sphi 0, %s21
    %s22 = sphi 0, %s19
    %s23 = sphi 0, %s22
    %s39 = sphi 0, %s23
    %s43 = sphi 0, %s43
    %s45 = sphi 0, %s43
    %s46 = sphi 0, %s45
    %s60 = sphi 0, %s46
    %s64 = sphi 0, %s64
    %s66 = sphi 0, %s64
    %s67 = sphi 0, %s66
    %s81 = sphi 0, %s67
    %s87 = sphi 0, %s89
    %s90 = sphi 0, %s87
    %s91 = sphi 0, %s90
    %s107 = sphi 0, %s91
  $region4: #{net_cnn_forward.3} parent=0 // loop_header_branch
    %12 = sbr.rel (%p10) target = $region8
  $region5: #{net_cnn_forward.3} parent=0 // loop_body
    %s14 = ssub.s32 %s9, 1
    %s15 = ssub.s32 %s9, 2
    %s16 = sadd.s32 %s9, 1
    %s17 = ssub.s32 %s9, %s16
    %p18 = scmp.eq.s32.totalorder %s17, 0
    %s20 = sadd.s32 %s19, 1
    %s21 = scalar_select %p18, %s19, %s20
    %p24 = pneg %p18
    %p25 = scmp.eq.s32.totalorder %s9, 6
    %p26 = por %p24, %p25
    %p27 = scmp.ne.s32.totalorder %s19, %s22
    %p28 = scmp.eq.s32.totalorder %s9, 0
    %p29 = por %p27, %p28
    %p30 = scmp.ne.s32.totalorder %s19, %s22
    %p31 = scmp.eq.s32.totalorder %s14, 6
    %p32 = por %p30, %p31
    %p33 = scmp.ne.s32.totalorder %s22, %s23
    %p34 = scmp.eq.s32.totalorder %s14, 0
    %p35 = por %p33, %p34
    %p36 = scmp.ne.s32.totalorder %s22, %s23
    %p37 = scmp.eq.s32.totalorder %s15, 6
    %p38 = por %p36, %p37
    %p40 = scmp.ne.s32.totalorder %s23, %s39
    %p41 = scmp.eq.s32.totalorder %s15, 0
    %p42 = por %p40, %p41
    %s44 = sadd.s32 %s43, 1
    %p47 = scmp.eq.s32.totalorder %s9, 6
    %p48 = scmp.ne.s32.totalorder %s43, %s45
    %p49 = scmp.eq.s32.totalorder %s9, 0
    %p50 = por %p48, %p49
    %p51 = scmp.ne.s32.totalorder %s43, %s45
    %p52 = scmp.eq.s32.totalorder %s14, 6
    %p53 = por %p51, %p52
    %p54 = scmp.ne.s32.totalorder %s45, %s46
    %p55 = scmp.eq.s32.totalorder %s14, 0
    %p56 = por %p54, %p55
    %p57 = scmp.ne.s32.totalorder %s45, %s46
    %p58 = scmp.eq.s32.totalorder %s15, 6
    %p59 = por %p57, %p58
    %p61 = scmp.ne.s32.totalorder %s46, %s60
    %p62 = scmp.eq.s32.totalorder %s15, 0
    %p63 = por %p61, %p62
    %s65 = sadd.s32 %s64, 1
    %p68 = scmp.eq.s32.totalorder %s9, 6
    %p69 = scmp.ne.s32.totalorder %s64, %s66
    %p70 = scmp.eq.s32.totalorder %s9, 0
    %p71 = por %p69, %p70
    %p72 = scmp.ne.s32.totalorder %s64, %s66
    %p73 = scmp.eq.s32.totalorder %s14, 6
    %p74 = por %p72, %p73
    %p75 = scmp.ne.s32.totalorder %s66, %s67
    %p76 = scmp.eq.s32.totalorder %s14, 0
    %p77 = por %p75, %p76
    %p78 = scmp.ne.s32.totalorder %s66, %s67
    %p79 = scmp.eq.s32.totalorder %s15, 6
    %p80 = por %p78, %p79
    %p82 = scmp.ne.s32.totalorder %s67, %s81
    %p83 = scmp.eq.s32.totalorder %s15, 0
    %p84 = por %p82, %p83
    %s85 = ssub.s32 %s9, %s16
    %p86 = scmp.eq.s32.totalorder %s85, 0
    %s88 = sadd.s32 %s87, 1
    %s89 = scalar_select %p86, %s87, %s88
    %p92 = pneg %p86
    %p93 = scmp.eq.s32.totalorder %s9, 6
    %p94 = por %p92, %p93
    %p95 = scmp.ne.s32.totalorder %s87, %s90
    %p96 = scmp.eq.s32.totalorder %s9, 0
    %p97 = por %p95, %p96
    %p98 = scmp.ne.s32.totalorder %s87, %s90
    %p99 = scmp.eq.s32.totalorder %s14, 6
    %p100 = por %p98, %p99
    %p101 = scmp.ne.s32.totalorder %s90, %s91
    %p102 = scmp.eq.s32.totalorder %s14, 0
    %p103 = por %p101, %p102
    %p104 = scmp.ne.s32.totalorder %s90, %s91
    %p105 = scmp.eq.s32.totalorder %s15, 6
    %p106 = por %p104, %p105
    %p108 = scmp.ne.s32.totalorder %s91, %s107
    %p109 = scmp.eq.s32.totalorder %s15, 0
    %p110 = por %p108, %p109
    %p111 = scmp.le.s32.totalorder 1, %s9
    %p112 = scmp.lt.s32.totalorder %s9, 8
    %p113 = pnand %p111, %p112
    %p114 = pneg %p113
    // Predicated region
    $region9: #{net_cnn_forward.3} parent=5 // pred_check
      _
    $region10: #{net_cnn_forward.3} parent=5 // pred_check_branch
      %116 = sbr.rel (%p113) target = $region12
    $region11: #{net_cnn_forward.3} parent=5 // pred_region
      %s117 = ssub.s32 %s9, 1
      // Predicated region
      $region13: #{net_cnn_forward.3} parent=11 // pred_check
        %p118 = pneg %p56
      $region14: #{net_cnn_forward.3} parent=11 // pred_check_branch
        %120 = sbr.rel (%p118) target = $region16
      $region15: #{net_cnn_forward.3} parent=11 // pred_region
        _
      $region16: #{net_cnn_forward.3} parent=11 // pred_fallthru
        _
      // Predicated region
      $region17: #{net_cnn_forward.3} parent=11 // pred_check
        %p121 = pneg %p77
      $region18: #{net_cnn_forward.3} parent=11 // pred_check_branch
        %123 = sbr.rel (%p121) target = $region20
      $region19: #{net_cnn_forward.3} parent=11 // pred_region
        _
      $region20: #{net_cnn_forward.3} parent=11 // pred_fallthru
        _
    $region12: #{net_cnn_forward.3} parent=5 // pred_fallthru
      _
    %p124 = scmp.lt.s32.totalorder %s9, 7
    // Predicated region
    $region21: #{net_cnn_forward.3} parent=5 // pred_check
      %p125 = pneg %p124
    $region22: #{net_cnn_forward.3} parent=5 // pred_check_branch
      %127 = sbr.rel (%p125) target = $region24
    $region23: #{net_cnn_forward.3} parent=5 // pred_region
      // Predicated region
      $region25: #{net_cnn_forward.3} parent=23 // pred_check
        %p128 = pneg %p29
      $region26: #{net_cnn_forward.3} parent=23 // pred_check_branch
        %130 = sbr.rel (%p128) target = $region28
      $region27: #{net_cnn_forward.3} parent=23 // pred_region
        %s131 = smul.u32 32, %s9
        %p132 = scmp.lt.s32.totalorder %s131, 223
        %s133 = scalar_select %p132, %s131, 223
        %s134 = smul.addr %s133, 4
        %s135 = scalar_lea.vmem %s0, %s134
        %s136 = smul.u32 32, %s9
      $region28: #{net_cnn_forward.3} parent=23 // pred_fallthru
        _
    $region24: #{net_cnn_forward.3} parent=5 // pred_fallthru
      _
    %p137 = scmp.le.s32.totalorder 1, %s9
    %p138 = scmp.lt.s32.totalorder %s9, 8
    %p139 = pnand %p137, %p138
    %p140 = pneg %p139
    // Predicated region
    $region29: #{net_cnn_forward.3} parent=5 // pred_check
      _
    $region30: #{net_cnn_forward.3} parent=5 // pred_check_branch
      %142 = sbr.rel (%p139) target = $region32
    $region31: #{net_cnn_forward.3} parent=5 // pred_region
      %s143 = ssub.s32 %s9, 1
      %s144 = smul.u32 32, %s14
      %p145 = scmp.lt.s32.totalorder %s144, 223
      %s146 = scalar_select %p145, %s144, 223
      %s147 = smul.addr %s146, 4
      %s148 = scalar_lea.vmem %s0, %s147
      %p149 = pneg %p35
      %p150 = pneg %p32
      %p151 = pneg %p56
      %p152 = pneg %p53
      %p153 = pneg %p77
      %p154 = pneg %p74
      %p155 = pneg %p103
      %p156 = pneg %p100
      %s157 = smul.u32 32, %s14
      %p158 = scmp.lt.s32.totalorder %s157, 223
      %s159 = scalar_select %p158, %s157, 223
      %s160 = smul.addr %s159, 8
      %s161 = scalar_lea.vmem %s3, %s160
      %s162 = smul.u32 32, %s14
      %p163 = scmp.lt.s32.totalorder %s162, 223
      %s164 = scalar_select %p163, %s162, 223
      %s165 = smul.addr %s164, 4
      %s166 = scalar_lea.vmem %s0, %s165
      %s167 = smul.u32 32, %s14
      %s168 = smul.u32 32, %s14
      %p169 = scmp.lt.s32.totalorder %s168, 223
      %s170 = scalar_select %p169, %s168, 223
      %s171 = smul.addr %s170, 8
      %s172 = scalar_lea.vmem %s3, %s171
      %s173 = smul.u32 32, %s14
      %v175 = vld [vmem:[%s166] sm:$0xf]
      %v176 = vld [vmem:[%s166 + $0x4] sm:$0xf]
      %v177 = vld [vmem:[%s166 + $0x8] sm:$0xf]
      %v178 = vld [vmem:[%s166 + $0xc] sm:$0xf]
      %v179 = vld [vmem:[%s166 + $0x10] sm:$0xf]
      %v180 = vld [vmem:[%s166 + $0x14] sm:$0xf]
      %v181 = vld [vmem:[%s166 + $0x18] sm:$0xf]
      %v182 = vld [vmem:[%s166 + $0x1c] sm:$0xf]
      %v183 = vld [vmem:[%s166 + $0x20] sm:$0xf]
      %v184 = vld [vmem:[%s166 + $0x24] sm:$0xf]
      %v185 = vld [vmem:[%s166 + $0x28] sm:$0xf]
      %v186 = vld [vmem:[%s166 + $0x2c] sm:$0xf]
      %v187 = vld [vmem:[%s166 + $0x30] sm:$0xf]
      %v188 = vld [vmem:[%s166 + $0x34] sm:$0xf]
      %v189 = vld [vmem:[%s166 + $0x38] sm:$0xf]
      %v190 = vld [vmem:[%s166 + $0x3c] sm:$0xf]
      %v191 = vld [vmem:[%s166 + $0x40] sm:$0xf]
      %v192 = vld [vmem:[%s166 + $0x44] sm:$0xf]
      %v193 = vld [vmem:[%s166 + $0x48] sm:$0xf]
      %v194 = vld [vmem:[%s166 + $0x4c] sm:$0xf]
      %v195 = vld [vmem:[%s166 + $0x50] sm:$0xf]
      %v196 = vld [vmem:[%s166 + $0x54] sm:$0xf]
      %v197 = vld [vmem:[%s166 + $0x58] sm:$0xf]
      %v198 = vld [vmem:[%s166 + $0x5c] sm:$0xf]
      %v199 = vld [vmem:[%s166 + $0x60] sm:$0xf]
      %v200 = vld [vmem:[%s166 + $0x64] sm:$0xf]
      %v201 = vld [vmem:[%s166 + $0x68] sm:$0xf]
      %v202 = vld [vmem:[%s166 + $0x6c] sm:$0xf]
      %v203 = vld [vmem:[%s166 + $0x70] sm:$0xf]
      %v204 = vld [vmem:[%s166 + $0x74] sm:$0xf]
      %v205 = vld [vmem:[%s166 + $0x78] sm:$0xf]
      %v206 = vld [vmem:[%s166 + $0x7c] sm:$0xf]
      %v207 = vld [vmem:[%s1] sm:$0xf]
      %v208 = vld [vmem:[%s1 + $0x4] sm:$0xf]
      %v209 = vld [vmem:[%s1 + $0x8] sm:$0xf]
      %v210 = vld [vmem:[%s1 + $0xc] sm:$0xf]
      %v211 = vld [vmem:[%s1 + $0x10] sm:$0xf]
      %v212 = vld [vmem:[%s1 + $0x14] sm:$0xf]
      %v213 = vld [vmem:[%s1 + $0x18] sm:$0xf]
      %v214 = vld [vmem:[%s1 + $0x1c] sm:$0xf]
      %v215 = vld [vmem:[%s1 + $0x20] sm:$0xf]
      %v216 = vld [vmem:[%s1 + $0x24] sm:$0xf]
      %v217 = vld [vmem:[%s1 + $0x28] sm:$0xf]
      %v218 = vld [vmem:[%s1 + $0x2c] sm:$0xf]
      %v219 = vld [vmem:[%s1 + $0x30] sm:$0xf]
      %v220 = vld [vmem:[%s1 + $0x34] sm:$0xf]
      %v221 = vld [vmem:[%s1 + $0x38] sm:$0xf]
      %v222 = vld [vmem:[%s1 + $0x3c] sm:$0xf]
      %v223 = vld [vmem:[%s2] sm:$0x1]
      %v225 = vlaneseq
      %v226 = vshrl.u32 %v225, 7
      %v227 = vsub.s32 0, %v226
      %v228 = vrot.slane %v223, %v227
      %v262 = vunpack.c.l.b16 %v175
      %v263 = vunpack.c.l.b16 %v176
      %v264 = vunpack.c.l.b16 %v177
      %v265 = vunpack.c.l.b16 %v178
      %v266 = vunpack.c.l.b16 %v179
      %v267 = vunpack.c.l.b16 %v180
      %v268 = vunpack.c.l.b16 %v181
      %v269 = vunpack.c.l.b16 %v182
      %v270 = vunpack.c.l.b16 %v183
      %v271 = vunpack.c.l.b16 %v184
      %v272 = vunpack.c.l.b16 %v185
      %v273 = vunpack.c.l.b16 %v186
      %v274 = vunpack.c.l.b16 %v187
      %v275 = vunpack.c.l.b16 %v188
      %v276 = vunpack.c.l.b16 %v189
      %v277 = vunpack.c.l.b16 %v190
      %v278 = vunpack.c.l.b16 %v191
      %v279 = vunpack.c.l.b16 %v192
      %v280 = vunpack.c.l.b16 %v193
      %v281 = vunpack.c.l.b16 %v194
      %v282 = vunpack.c.l.b16 %v195
      %v283 = vunpack.c.l.b16 %v196
      %v284 = vunpack.c.l.b16 %v197
      %v285 = vunpack.c.l.b16 %v198
      %v286 = vunpack.c.l.b16 %v199
      %v287 = vunpack.c.l.b16 %v200
      %v288 = vunpack.c.l.b16 %v201
      %v289 = vunpack.c.l.b16 %v202
      %v290 = vunpack.c.l.b16 %v203
      %v291 = vunpack.c.l.b16 %v204
      %v292 = vunpack.c.l.b16 %v205
      %v293 = vunpack.c.l.b16 %v206
      %v294 = vpack.c.b16 %v263, %v262
      %v295 = vpack.c.b16 %v265, %v264
      %v296 = vpack.c.b16 %v267, %v266
      %v297 = vpack.c.b16 %v269, %v268
      %v298 = vpack.c.b16 %v271, %v270
      %v299 = vpack.c.b16 %v273, %v272
      %v300 = vpack.c.b16 %v275, %v274
      %v301 = vpack.c.b16 %v277, %v276
      %v302 = vpack.c.b16 %v279, %v278
      %v303 = vpack.c.b16 %v281, %v280
      %v304 = vpack.c.b16 %v283, %v282
      %v305 = vpack.c.b16 %v285, %v284
      %v306 = vpack.c.b16 %v287, %v286
      %v307 = vpack.c.b16 %v289, %v288
      %v308 = vpack.c.b16 %v291, %v290
      %v309 = vpack.c.b16 %v293, %v292
      %v342 = vunpack.c.l.b16 %v207
      %v343 = vunpack.c.l.b16 %v208
      %v344 = vunpack.c.l.b16 %v209
      %v345 = vunpack.c.l.b16 %v210
      %v346 = vunpack.c.l.b16 %v211
      %v347 = vunpack.c.l.b16 %v212
      %v348 = vunpack.c.l.b16 %v213
      %v349 = vunpack.c.l.b16 %v214
      %v350 = vunpack.c.l.b16 %v215
      %v351 = vunpack.c.l.b16 %v216
      %v352 = vunpack.c.l.b16 %v217
      %v353 = vunpack.c.l.b16 %v218
      %v354 = vunpack.c.l.b16 %v219
      %v355 = vunpack.c.l.b16 %v220
      %v356 = vunpack.c.l.b16 %v221
      %v357 = vunpack.c.l.b16 %v222
      %v358 = vpack.c.b16 %v343, %v342
      %v359 = vpack.c.b16 %v345, %v344
      %v360 = vpack.c.b16 %v347, %v346
      %v361 = vpack.c.b16 %v349, %v348
      %v362 = vpack.c.b16 %v351, %v350
      %v363 = vpack.c.b16 %v353, %v352
      %v364 = vpack.c.b16 %v355, %v354
      %v365 = vpack.c.b16 %v357, %v356
      %374 = vmatprep.subr.bf16.mxu0 0
      %375 = vmatpush1.bf16.msra.mxu0 %v358
      %376 = vmatprep.subr.bf16.mxu0 0
      %377 = vmatpush1.bf16.msra.mxu0 %v359
      %378 = vmatprep.subr.bf16.mxu0 0
      %379 = vmatpush1.bf16.msra.mxu0 %v360
      %380 = vmatprep.subr.bf16.mxu0 0
      %381 = vmatpush1.bf16.msra.mxu0 %v361
      %382 = vmatprep.subr.bf16.mxu0 0
      %383 = vmatpush1.bf16.msra.mxu0 %v362
      %384 = vmatprep.subr.bf16.mxu0 0
      %385 = vmatpush1.bf16.msra.mxu0 %v363
      %386 = vmatprep.subr.bf16.mxu0 0
      %387 = vmatpush1.bf16.msra.mxu0 %v364
      %388 = vmatprep.subr.bf16.mxu0 0
      %389 = vmatpush1.bf16.msra.mxu0 %v365
      %390 = vmatprep.subr.bf16.mxu0 0
      %391 = vmatpush1.bf16.msra.mxu0 0
      %392 = vmatprep.subr.bf16.mxu0 0
      %393 = vmatpush1.bf16.msra.mxu0 0
      %394 = vmatprep.subr.bf16.mxu0 0
      %395 = vmatpush1.bf16.msra.mxu0 0
      %396 = vmatprep.subr.bf16.mxu0 0
      %397 = vmatpush1.bf16.msra.mxu0 0
      %398 = vmatprep.subr.bf16.mxu0 0
      %399 = vmatpush1.bf16.msra.mxu0 0
      %400 = vmatprep.subr.bf16.mxu0 0
      %401 = vmatpush1.bf16.msra.mxu0 0
      %402 = vmatprep.subr.bf16.mxu0 0
      %403 = vmatpush1.bf16.msra.mxu0 0
      %404 = vmatprep.subr.bf16.mxu0 0
      %405 = vmatpush1.bf16.msra.mxu0 0
      %406 = vmatprep.mubr.bf16.mxu0 0
      %407 = vmatmul.mubr.bf16.gmra.mrb[0].mxu0 %v294
      %v408 = vpop.f32.mrb[0].mxu0
      %v409 = vadd.f32 %v228, %v408
      %v410 = vpop.f32.mrb[0].mxu0
      %v411 = vpop.f32.mrb[0].mxu0
      %v412 = vadd.f32 %v228, %v411
      %v413 = vpop.f32.mrb[0].mxu0
      %414 = vmatprep.mubr.bf16.mxu0 0
      %415 = vmatmul.mubr.bf16.gmra.mrb[0].mxu0 %v295
      %v416 = vpop.f32.mrb[0].mxu0
      %v417 = vadd.f32 %v228, %v416
      %v418 = vpop.f32.mrb[0].mxu0
      %v419 = vpop.f32.mrb[0].mxu0
      %v420 = vadd.f32 %v228, %v419
      %v421 = vpop.f32.mrb[0].mxu0
      %422 = vmatprep.mubr.bf16.mxu0 0
      %423 = vmatmul.mubr.bf16.gmra.mrb[0].mxu0 %v296
      %v424 = vpop.f32.mrb[0].mxu0
      %v425 = vadd.f32 %v228, %v424
      %v426 = vpop.f32.mrb[0].mxu0
      %v427 = vpop.f32.mrb[0].mxu0
      %v428 = vadd.f32 %v228, %v427
      %v429 = vpop.f32.mrb[0].mxu0
      %430 = vmatprep.mubr.bf16.mxu0 0
      %431 = vmatmul.mubr.bf16.gmra.mrb[0].mxu0 %v297
      %v432 = vpop.f32.mrb[0].mxu0
      %v433 = vadd.f32 %v228, %v432
      %v434 = vpop.f32.mrb[0].mxu0
      %v435 = vpop.f32.mrb[0].mxu0
      %v436 = vadd.f32 %v228, %v435
      %v437 = vpop.f32.mrb[0].mxu0
      %438 = vmatprep.mubr.bf16.mxu0 0
      %439 = vmatmul.mubr.bf16.gmra.mrb[0].mxu0 %v298
      %v440 = vpop.f32.mrb[0].mxu0
      %v441 = vadd.f32 %v228, %v440
      %v442 = vpop.f32.mrb[0].mxu0
      %v443 = vpop.f32.mrb[0].mxu0
      %v444 = vadd.f32 %v228, %v443
      %v445 = vpop.f32.mrb[0].mxu0
      %446 = vmatprep.mubr.bf16.mxu0 0
      %447 = vmatmul.mubr.bf16.gmra.mrb[0].mxu0 %v299
      %v448 = vpop.f32.mrb[0].mxu0
      %v449 = vadd.f32 %v228, %v448
      %v450 = vpop.f32.mrb[0].mxu0
      %v451 = vpop.f32.mrb[0].mxu0
      %v452 = vadd.f32 %v228, %v451
      %v453 = vpop.f32.mrb[0].mxu0
      %454 = vmatprep.mubr.bf16.mxu0 0
      %455 = vmatmul.mubr.bf16.gmra.mrb[0].mxu0 %v300
      %v456 = vpop.f32.mrb[0].mxu0
      %v457 = vadd.f32 %v228, %v456
      %v458 = vpop.f32.mrb[0].mxu0
      %v459 = vpop.f32.mrb[0].mxu0
      %v460 = vadd.f32 %v228, %v459
      %v461 = vpop.f32.mrb[0].mxu0
      %462 = vmatprep.mubr.bf16.mxu0 0
      %463 = vmatmul.mubr.bf16.gmra.mrb[0].mxu0 %v301
      %v464 = vpop.f32.mrb[0].mxu0
      %v465 = vadd.f32 %v228, %v464
      %v466 = vpop.f32.mrb[0].mxu0
      %v467 = vpop.f32.mrb[0].mxu0
      %v468 = vadd.f32 %v228, %v467
      %v469 = vpop.f32.mrb[0].mxu0
      %470 = vmatprep.mubr.bf16.mxu0 0
      %471 = vmatmul.mubr.bf16.gmra.mrb[0].mxu0 %v302
      %v472 = vpop.f32.mrb[0].mxu0
      %v473 = vadd.f32 %v228, %v472
      %v474 = vpop.f32.mrb[0].mxu0
      %v475 = vpop.f32.mrb[0].mxu0
      %v476 = vadd.f32 %v228, %v475
      %v477 = vpop.f32.mrb[0].mxu0
      %478 = vmatprep.mubr.bf16.mxu0 0
      %479 = vmatmul.mubr.bf16.gmra.mrb[0].mxu0 %v303
      %v480 = vpop.f32.mrb[0].mxu0
      %v481 = vadd.f32 %v228, %v480
      %v482 = vpop.f32.mrb[0].mxu0
      %v483 = vpop.f32.mrb[0].mxu0
      %v484 = vadd.f32 %v228, %v483
      %v485 = vpop.f32.mrb[0].mxu0
      %486 = vmatprep.mubr.bf16.mxu0 0
      %487 = vmatmul.mubr.bf16.gmra.mrb[0].mxu0 %v304
      %v488 = vpop.f32.mrb[0].mxu0
      %v489 = vadd.f32 %v228, %v488
      %v490 = vpop.f32.mrb[0].mxu0
      %v491 = vpop.f32.mrb[0].mxu0
      %v492 = vadd.f32 %v228, %v491
      %v493 = vpop.f32.mrb[0].mxu0
      %494 = vmatprep.mubr.bf16.mxu0 0
      %495 = vmatmul.mubr.bf16.gmra.mrb[0].mxu0 %v305
      %v496 = vpop.f32.mrb[0].mxu0
      %v497 = vadd.f32 %v228, %v496
      %v498 = vpop.f32.mrb[0].mxu0
      %v499 = vpop.f32.mrb[0].mxu0
      %v500 = vadd.f32 %v228, %v499
      %v501 = vpop.f32.mrb[0].mxu0
      %502 = vmatprep.mubr.bf16.mxu0 0
      %503 = vmatmul.mubr.bf16.gmra.mrb[0].mxu0 %v306
      %v504 = vpop.f32.mrb[0].mxu0
      %v505 = vadd.f32 %v228, %v504
      %v506 = vpop.f32.mrb[0].mxu0
      %v507 = vpop.f32.mrb[0].mxu0
      %v508 = vadd.f32 %v228, %v507
      %v509 = vpop.f32.mrb[0].mxu0
      %510 = vmatprep.mubr.bf16.mxu0 0
      %511 = vmatmul.mubr.bf16.gmra.mrb[0].mxu0 %v307
      %v512 = vpop.f32.mrb[0].mxu0
      %v513 = vadd.f32 %v228, %v512
      %v514 = vpop.f32.mrb[0].mxu0
      %v515 = vpop.f32.mrb[0].mxu0
      %v516 = vadd.f32 %v228, %v515
      %v517 = vpop.f32.mrb[0].mxu0
      %518 = vmatprep.mubr.bf16.mxu0 0
      %519 = vmatmul.mubr.bf16.gmra.mrb[0].mxu0 %v308
      %v520 = vpop.f32.mrb[0].mxu0
      %v521 = vadd.f32 %v228, %v520
      %v522 = vpop.f32.mrb[0].mxu0
      %v523 = vpop.f32.mrb[0].mxu0
      %v524 = vadd.f32 %v228, %v523
      %v525 = vpop.f32.mrb[0].mxu0
      %526 = vmatprep.mubr.bf16.mxu0 0
      %527 = vmatmul.mubr.bf16.gmra.mrb[0].mxu0 %v309
      %v528 = vpop.f32.mrb[0].mxu0
      %v529 = vadd.f32 %v228, %v528
      %v530 = vpop.f32.mrb[0].mxu0
      %v531 = vpop.f32.mrb[0].mxu0
      %v532 = vadd.f32 %v228, %v531
      %v533 = vpop.f32.mrb[0].mxu0
      %534 = vdwg.mxu0
      %v535 = vmax.f32 %v409, 0.0
      %v536 = vmax.f32 %v412, 0.0
      %v537 = vmax.f32 %v417, 0.0
      %v538 = vmax.f32 %v420, 0.0
      %v539 = vmax.f32 %v425, 0.0
      %v540 = vmax.f32 %v428, 0.0
      %v541 = vmax.f32 %v433, 0.0
      %v542 = vmax.f32 %v436, 0.0
      %v543 = vmax.f32 %v441, 0.0
      %v544 = vmax.f32 %v444, 0.0
      %v545 = vmax.f32 %v449, 0.0
      %v546 = vmax.f32 %v452, 0.0
      %v547 = vmax.f32 %v457, 0.0
      %v548 = vmax.f32 %v460, 0.0
      %v549 = vmax.f32 %v465, 0.0
      %v550 = vmax.f32 %v468, 0.0
      %v551 = vmax.f32 %v473, 0.0
      %v552 = vmax.f32 %v476, 0.0
      %v553 = vmax.f32 %v481, 0.0
      %v554 = vmax.f32 %v484, 0.0
      %v555 = vmax.f32 %v489, 0.0
      %v556 = vmax.f32 %v492, 0.0
      %v557 = vmax.f32 %v497, 0.0
      %v558 = vmax.f32 %v500, 0.0
      %v559 = vmax.f32 %v505, 0.0
      %v560 = vmax.f32 %v508, 0.0
      %v561 = vmax.f32 %v513, 0.0
      %v562 = vmax.f32 %v516, 0.0
      %v563 = vmax.f32 %v521, 0.0
      %v564 = vmax.f32 %v524, 0.0
      %v565 = vmax.f32 %v529, 0.0
      %v566 = vmax.f32 %v532, 0.0
      %567 = vst [vmem:[%s172] sm:$0xff] %v535
      %568 = vst [vmem:[%s172 + $0x8] sm:$0xff] %v536
      %569 = vst [vmem:[%s172 + $0x10] sm:$0xff] %v537
      %570 = vst [vmem:[%s172 + $0x18] sm:$0xff] %v538
      %571 = vst [vmem:[%s172 + $0x20] sm:$0xff] %v539
      %572 = vst [vmem:[%s172 + $0x28] sm:$0xff] %v540
      %573 = vst [vmem:[%s172 + $0x30] sm:$0xff] %v541
      %574 = vst [vmem:[%s172 + $0x38] sm:$0xff] %v542
      %575 = vst [vmem:[%s172 + $0x40] sm:$0xff] %v543
      %576 = vst [vmem:[%s172 + $0x48] sm:$0xff] %v544
      %577 = vst [vmem:[%s172 + $0x50] sm:$0xff] %v545
      %578 = vst [vmem:[%s172 + $0x58] sm:$0xff] %v546
      %579 = vst [vmem:[%s172 + $0x60] sm:$0xff] %v547
      %580 = vst [vmem:[%s172 + $0x68] sm:$0xff] %v548
      %581 = vst [vmem:[%s172 + $0x70] sm:$0xff] %v549
      %582 = vst [vmem:[%s172 + $0x78] sm:$0xff] %v550
      %583 = vst [vmem:[%s172 + $0x80] sm:$0xff] %v551
      %584 = vst [vmem:[%s172 + $0x88] sm:$0xff] %v552
      %585 = vst [vmem:[%s172 + $0x90] sm:$0xff] %v553
      %586 = vst [vmem:[%s172 + $0x98] sm:$0xff] %v554
      %587 = vst [vmem:[%s172 + $0xa0] sm:$0xff] %v555
      %588 = vst [vmem:[%s172 + $0xa8] sm:$0xff] %v556
      %589 = vst [vmem:[%s172 + $0xb0] sm:$0xff] %v557
      %590 = vst [vmem:[%s172 + $0xb8] sm:$0xff] %v558
      %591 = vst [vmem:[%s172 + $0xc0] sm:$0xff] %v559
      %592 = vst [vmem:[%s172 + $0xc8] sm:$0xff] %v560
      %593 = vst [vmem:[%s172 + $0xd0] sm:$0xff] %v561
      %594 = vst [vmem:[%s172 + $0xd8] sm:$0xff] %v562
      %595 = vst [vmem:[%s172 + $0xe0] sm:$0xff] %v563
      %596 = vst [vmem:[%s172 + $0xe8] sm:$0xff] %v564
      %597 = vst [vmem:[%s172 + $0xf0] sm:$0xff] %v565
      %598 = vst [vmem:[%s172 + $0xf8] sm:$0xff] %v566
      %s599 = smul.u32 32, %s14
      %p600 = scmp.lt.s32.totalorder %s599, 223
      %s601 = scalar_select %p600, %s599, 223
      %s602 = smul.addr %s601, 8
      %s603 = scalar_lea.vmem %s3, %s602
      // Predicated region
      $region33: #{net_cnn_forward.3} parent=31 // pred_check
        %p604 = pneg %p100
      $region34: #{net_cnn_forward.3} parent=31 // pred_check_branch
        %606 = sbr.rel (%p604) target = $region36
      $region35: #{net_cnn_forward.3} parent=31 // pred_region
        %s607 = smul.u32 32, %s14
      $region36: #{net_cnn_forward.3} parent=31 // pred_fallthru
        _
    $region32: #{net_cnn_forward.3} parent=5 // pred_fallthru
      _
    %p608 = scmp.le.s32.totalorder 2, %s9
    // Predicated region
    $region37: #{net_cnn_forward.3} parent=5 // pred_check
      %p609 = pneg %p608
    $region38: #{net_cnn_forward.3} parent=5 // pred_check_branch
      %611 = sbr.rel (%p609) target = $region40
    $region39: #{net_cnn_forward.3} parent=5 // pred_region
      %s612 = ssub.s32 %s9, 2
      // Predicated region
      $region41: #{net_cnn_forward.3} parent=39 // pred_check
        %p613 = pneg %p106
      $region42: #{net_cnn_forward.3} parent=39 // pred_check_branch
        %615 = sbr.rel (%p613) target = $region44
      $region43: #{net_cnn_forward.3} parent=39 // pred_region
        %s616 = smul.u32 32, %s15
        %p617 = scmp.lt.s32.totalorder %s616, 223
        %s618 = scalar_select %p617, %s616, 223
        %s619 = smul.addr %s618, 8
        %s620 = scalar_lea.vmem %s3, %s619
      $region44: #{net_cnn_forward.3} parent=39 // pred_fallthru
        _
    $region40: #{net_cnn_forward.3} parent=5 // pred_fallthru
      _
  $region6: #{net_cnn_forward.3} parent=0 // loop_footer
    %s13 = sadd.s32 1, %s9
  $region7: #{net_cnn_forward.3} parent=0 // loop_footer_branch
    %8 = sbr.rel target = $region3
  $region8: #{net_cnn_forward.3} parent=0 // loop_exit
    _

// kernel: net_cnn_forward.4
$region0: #{net_cnn_forward.4}
  #allocation0 [shape = 'u32[]', space=smem, size = 0x4, offset = 0x4, fixed_abs, tag = 'smem constant byte address 0x4 - core index']
  #allocation1 [shape = 'u32[144,128]{1,0:T(1,128)}', space=vmem, size = 0x12000, scoped, tag = 'internal scratch']
  %s0 = inlined_call_operand.vmem [shape: bf16[200,256], index: 0, kind: input, shape index: {}]
  %s1 = inlined_call_operand.vmem [shape: bf16[256,128], index: 1, kind: input, shape index: {}]
  %s2 = inlined_call_operand.vmem [shape: f32[1,128], index: 2, kind: input, shape index: {}]
  %s3 = inlined_call_operand.vmem [shape: f32[200,128], index: 3, kind: output, shape index: {}]
  %s4 = sld [smem:[#allocation0]]
  $region22: #{net_cnn_forward.4} parent=0
    _
  %s6 = ssub.s32 1, %s4
  %s7 = scalar_select 0, %s6, %s4
  // Predicated region
  $region2: #{net_cnn_forward.4} parent=0 // pred_check
    _
  $region3: #{net_cnn_forward.4} parent=0 // pred_check_branch
    %9 = sbr.rel (0) target = $region5
  $region4: #{net_cnn_forward.4} parent=0 // pred_region
    _
  $region5: #{net_cnn_forward.4} parent=0 // pred_fallthru
    _
  // Predicated region
  $region6: #{net_cnn_forward.4} parent=0 // pred_check
    _
  $region7: #{net_cnn_forward.4} parent=0 // pred_check_branch
    %11 = sbr.rel (0) target = $region9
  $region8: #{net_cnn_forward.4} parent=0 // pred_region
    _
  $region9: #{net_cnn_forward.4} parent=0 // pred_fallthru
    _
  // Predicated region
  $region10: #{net_cnn_forward.4} parent=0 // pred_check
    _
  $region11: #{net_cnn_forward.4} parent=0 // pred_check_branch
    %13 = sbr.rel (0) target = $region13
  $region12: #{net_cnn_forward.4} parent=0 // pred_region
    _
  $region13: #{net_cnn_forward.4} parent=0 // pred_fallthru
    _
  %v15 = vld [vmem:[%s0] sm:$0xff]
  %v16 = vld [vmem:[%s0 + $0x8] sm:$0xff]
  %v17 = vld [vmem:[%s0 + $0x10] sm:$0xff]
  %v18 = vld [vmem:[%s0 + $0x18] sm:$0xff]
  %v19 = vld [vmem:[%s0 + $0x20] sm:$0xff]
  %v20 = vld [vmem:[%s0 + $0x28] sm:$0xff]
  %v21 = vld [vmem:[%s0 + $0x30] sm:$0xff]
  %v22 = vld [vmem:[%s0 + $0x38] sm:$0xff]
  %v23 = vld [vmem:[%s0 + $0x40] sm:$0xff]
  %v24 = vld [vmem:[%s0 + $0x48] sm:$0xff]
  %v25 = vld [vmem:[%s0 + $0x50] sm:$0xff]
  %v26 = vld [vmem:[%s0 + $0x58] sm:$0xff]
  %v27 = vld [vmem:[%s0 + $0x60] sm:$0xff]
  %v28 = vld [vmem:[%s0 + $0x68] sm:$0xff]
  %v29 = vld [vmem:[%s0 + $0x70] sm:$0xff]
  %v30 = vld [vmem:[%s0 + $0x78] sm:$0xff]
  %v31 = vld [vmem:[%s0 + $0x80] sm:$0xff]
  %v32 = vld [vmem:[%s0 + $0x88] sm:$0xff]
  %v33 = vld [vmem:[%s0 + $0x90] sm:$0xff]
  %v34 = vld [vmem:[%s0 + $0x98] sm:$0xff]
  %v35 = vld [vmem:[%s0 + $0xa0] sm:$0xff]
  %v36 = vld [vmem:[%s0 + $0xa8] sm:$0xff]
  %v37 = vld [vmem:[%s0 + $0xb0] sm:$0xff]
  %v38 = vld [vmem:[%s0 + $0xb8] sm:$0xff]
  %v39 = vld [vmem:[%s0 + $0xc0] sm:$0xff]
  %v40 = vld [vmem:[%s1] sm:$0xf]
  %v41 = vld [vmem:[%s1 + $0x4] sm:$0xf]
  %v42 = vld [vmem:[%s1 + $0x8] sm:$0xf]
  %v43 = vld [vmem:[%s1 + $0xc] sm:$0xf]
  %v44 = vld [vmem:[%s1 + $0x10] sm:$0xf]
  %v45 = vld [vmem:[%s1 + $0x14] sm:$0xf]
  %v46 = vld [vmem:[%s1 + $0x18] sm:$0xf]
  %v47 = vld [vmem:[%s1 + $0x1c] sm:$0xf]
  %v48 = vld [vmem:[%s1 + $0x20] sm:$0xf]
  %v49 = vld [vmem:[%s1 + $0x24] sm:$0xf]
  %v50 = vld [vmem:[%s1 + $0x28] sm:$0xf]
  %v51 = vld [vmem:[%s1 + $0x2c] sm:$0xf]
  %v52 = vld [vmem:[%s1 + $0x30] sm:$0xf]
  %v53 = vld [vmem:[%s1 + $0x34] sm:$0xf]
  %v54 = vld [vmem:[%s1 + $0x38] sm:$0xf]
  %v55 = vld [vmem:[%s1 + $0x3c] sm:$0xf]
  %v56 = vld [vmem:[%s1 + $0x40] sm:$0xf]
  %v57 = vld [vmem:[%s1 + $0x44] sm:$0xf]
  %v58 = vld [vmem:[%s1 + $0x48] sm:$0xf]
  %v59 = vld [vmem:[%s1 + $0x4c] sm:$0xf]
  %v60 = vld [vmem:[%s1 + $0x50] sm:$0xf]
  %v61 = vld [vmem:[%s1 + $0x54] sm:$0xf]
  %v62 = vld [vmem:[%s1 + $0x58] sm:$0xf]
  %v63 = vld [vmem:[%s1 + $0x5c] sm:$0xf]
  %v64 = vld [vmem:[%s1 + $0x60] sm:$0xf]
  %v65 = vld [vmem:[%s1 + $0x64] sm:$0xf]
  %v66 = vld [vmem:[%s1 + $0x68] sm:$0xf]
  %v67 = vld [vmem:[%s1 + $0x6c] sm:$0xf]
  %v68 = vld [vmem:[%s1 + $0x70] sm:$0xf]
  %v69 = vld [vmem:[%s1 + $0x74] sm:$0xf]
  %v70 = vld [vmem:[%s1 + $0x78] sm:$0xf]
  %v71 = vld [vmem:[%s1 + $0x7c] sm:$0xf]
  %v72 = vld [vmem:[%s2] sm:$0x1]
  %v74 = vlaneseq
  %v75 = vshrl.u32 %v74, 7
  %v76 = vsub.s32 0, %v75
  %v77 = vrot.slane %v72, %v76
  %v104 = vunpack.c.l.b16 %v15
  %v105 = vunpack.c.h.b16 %v15
  %v106 = vunpack.c.l.b16 %v16
  %v107 = vunpack.c.h.b16 %v16
  %v108 = vunpack.c.l.b16 %v17
  %v109 = vunpack.c.h.b16 %v17
  %v110 = vunpack.c.l.b16 %v18
  %v111 = vunpack.c.h.b16 %v18
  %v112 = vunpack.c.l.b16 %v19
  %v113 = vunpack.c.h.b16 %v19
  %v114 = vunpack.c.l.b16 %v20
  %v115 = vunpack.c.h.b16 %v20
  %v116 = vunpack.c.l.b16 %v21
  %v117 = vunpack.c.h.b16 %v21
  %v118 = vunpack.c.l.b16 %v22
  %v119 = vunpack.c.h.b16 %v22
  %v120 = vunpack.c.l.b16 %v23
  %v121 = vunpack.c.h.b16 %v23
  %v122 = vunpack.c.l.b16 %v24
  %v123 = vunpack.c.h.b16 %v24
  %v124 = vunpack.c.l.b16 %v25
  %v125 = vunpack.c.h.b16 %v25
  %v126 = vunpack.c.l.b16 %v26
  %v127 = vunpack.c.h.b16 %v26
  %v128 = vunpack.c.l.b16 %v27
  %v129 = vunpack.c.h.b16 %v27
  %v130 = vunpack.c.l.b16 %v28
  %v131 = vunpack.c.h.b16 %v28
  %v132 = vunpack.c.l.b16 %v29
  %v133 = vunpack.c.h.b16 %v29
  %v134 = vunpack.c.l.b16 %v30
  %v135 = vunpack.c.h.b16 %v30
  %v136 = vunpack.c.l.b16 %v31
  %v137 = vunpack.c.h.b16 %v31
  %v138 = vunpack.c.l.b16 %v32
  %v139 = vunpack.c.h.b16 %v32
  %v140 = vunpack.c.l.b16 %v33
  %v141 = vunpack.c.h.b16 %v33
  %v142 = vunpack.c.l.b16 %v34
  %v143 = vunpack.c.h.b16 %v34
  %v144 = vunpack.c.l.b16 %v35
  %v145 = vunpack.c.h.b16 %v35
  %v146 = vunpack.c.l.b16 %v36
  %v147 = vunpack.c.h.b16 %v36
  %v148 = vunpack.c.l.b16 %v37
  %v149 = vunpack.c.h.b16 %v37
  %v150 = vunpack.c.l.b16 %v38
  %v151 = vunpack.c.h.b16 %v38
  %v152 = vunpack.c.l.b16 %v39
  %v153 = vunpack.c.h.b16 %v39
  %v154 = vpack.c.b16 %v106, %v104
  %v155 = vpack.c.b16 %v107, %v105
  %v156 = vpack.c.b16 %v110, %v108
  %v157 = vpack.c.b16 %v111, %v109
  %v158 = vpack.c.b16 %v114, %v112
  %v159 = vpack.c.b16 %v115, %v113
  %v160 = vpack.c.b16 %v118, %v116
  %v161 = vpack.c.b16 %v119, %v117
  %v162 = vpack.c.b16 %v122, %v120
  %v163 = vpack.c.b16 %v123, %v121
  %v164 = vpack.c.b16 %v126, %v124
  %v165 = vpack.c.b16 %v127, %v125
  %v166 = vpack.c.b16 %v130, %v128
  %v167 = vpack.c.b16 %v131, %v129
  %v168 = vpack.c.b16 %v134, %v132
  %v169 = vpack.c.b16 %v135, %v133
  %v170 = vpack.c.b16 %v138, %v136
  %v171 = vpack.c.b16 %v139, %v137
  %v172 = vpack.c.b16 %v142, %v140
  %v173 = vpack.c.b16 %v143, %v141
  %v174 = vpack.c.b16 %v146, %v144
  %v175 = vpack.c.b16 %v147, %v145
  %v176 = vpack.c.b16 %v150, %v148
  %v177 = vpack.c.b16 %v151, %v149
  %v178 = vpack.c.b16 %v152, %v152
  %v179 = vpack.c.b16 %v153, %v153
  %v238 = vunpack.c.l.b16 %v40
  %v239 = vunpack.c.l.b16 %v41
  %v240 = vunpack.c.l.b16 %v42
  %v241 = vunpack.c.l.b16 %v43
  %v242 = vunpack.c.l.b16 %v44
  %v243 = vunpack.c.l.b16 %v45
  %v244 = vunpack.c.l.b16 %v46
  %v245 = vunpack.c.l.b16 %v47
  %v246 = vunpack.c.l.b16 %v48
  %v247 = vunpack.c.l.b16 %v49
  %v248 = vunpack.c.l.b16 %v50
  %v249 = vunpack.c.l.b16 %v51
  %v250 = vunpack.c.l.b16 %v52
  %v251 = vunpack.c.l.b16 %v53
  %v252 = vunpack.c.l.b16 %v54
  %v253 = vunpack.c.l.b16 %v55
  %v254 = vunpack.c.l.b16 %v56
  %v255 = vunpack.c.l.b16 %v57
  %v256 = vunpack.c.l.b16 %v58
  %v257 = vunpack.c.l.b16 %v59
  %v258 = vunpack.c.l.b16 %v60
  %v259 = vunpack.c.l.b16 %v61
  %v260 = vunpack.c.l.b16 %v62
  %v261 = vunpack.c.l.b16 %v63
  %v262 = vunpack.c.l.b16 %v64
  %v263 = vunpack.c.l.b16 %v65
  %v264 = vunpack.c.l.b16 %v66
  %v265 = vunpack.c.l.b16 %v67
  %v266 = vunpack.c.l.b16 %v68
  %v267 = vunpack.c.l.b16 %v69
  %v268 = vunpack.c.l.b16 %v70
  %v269 = vunpack.c.l.b16 %v71
  %v270 = vpack.c.b16 %v239, %v238
  %v271 = vpack.c.b16 %v241, %v240
  %v272 = vpack.c.b16 %v243, %v242
  %v273 = vpack.c.b16 %v245, %v244
  %v274 = vpack.c.b16 %v247, %v246
  %v275 = vpack.c.b16 %v249, %v248
  %v276 = vpack.c.b16 %v251, %v250
  %v277 = vpack.c.b16 %v253, %v252
  %v278 = vpack.c.b16 %v255, %v254
  %v279 = vpack.c.b16 %v257, %v256
  %v280 = vpack.c.b16 %v259, %v258
  %v281 = vpack.c.b16 %v261, %v260
  %v282 = vpack.c.b16 %v263, %v262
  %v283 = vpack.c.b16 %v265, %v264
  %v284 = vpack.c.b16 %v267, %v266
  %v285 = vpack.c.b16 %v269, %v268
  %302 = vmatprep.subr.bf16.mxu0 0
  %303 = vmatpush1.bf16.msra.mxu0 %v270
  %304 = vmatprep.subr.bf16.mxu0 0
  %305 = vmatpush1.bf16.msra.mxu0 %v271
  %306 = vmatprep.subr.bf16.mxu0 0
  %307 = vmatpush1.bf16.msra.mxu0 %v272
  %308 = vmatprep.subr.bf16.mxu0 0
  %309 = vmatpush1.bf16.msra.mxu0 %v273
  %310 = vmatprep.subr.bf16.mxu0 0
  %311 = vmatpush1.bf16.msra.mxu0 %v274
  %312 = vmatprep.subr.bf16.mxu0 0
  %313 = vmatpush1.bf16.msra.mxu0 %v275
  %314 = vmatprep.subr.bf16.mxu0 0
  %315 = vmatpush1.bf16.msra.mxu0 %v276
  %316 = vmatprep.subr.bf16.mxu0 0
  %317 = vmatpush1.bf16.msra.mxu0 %v277
  %318 = vmatprep.subr.bf16.mxu0 0
  %319 = vmatpush1.bf16.msra.mxu0 %v278
  %320 = vmatprep.subr.bf16.mxu0 0
  %321 = vmatpush1.bf16.msra.mxu0 %v279
  %322 = vmatprep.subr.bf16.mxu0 0
  %323 = vmatpush1.bf16.msra.mxu0 %v280
  %324 = vmatprep.subr.bf16.mxu0 0
  %325 = vmatpush1.bf16.msra.mxu0 %v281
  %326 = vmatprep.subr.bf16.mxu0 0
  %327 = vmatpush1.bf16.msra.mxu0 %v282
  %328 = vmatprep.subr.bf16.mxu0 0
  %329 = vmatpush1.bf16.msra.mxu0 %v283
  %330 = vmatprep.subr.bf16.mxu0 0
  %331 = vmatpush1.bf16.msra.mxu0 %v284
  %332 = vmatprep.subr.bf16.mxu0 0
  %333 = vmatpush1.bf16.msra.mxu0 %v285
  %334 = vmatprep.mubr.bf16.mxu0 %v155
  %335 = vmatmul.mubr.bf16.gmra.mrb[0].mxu0 %v154
  %v336 = vpop.f32.mrb[0].mxu0
  %v337 = vadd.f32 %v77, %v336
  %v338 = vpop.f32.mrb[0].mxu0
  %v339 = vpop.f32.mrb[0].mxu0
  %v340 = vadd.f32 %v77, %v339
  %v341 = vpop.f32.mrb[0].mxu0
  %342 = vmatprep.mubr.bf16.mxu0 %v157
  %343 = vmatmul.mubr.bf16.gmra.mrb[0].mxu0 %v156
  %v344 = vpop.f32.mrb[0].mxu0
  %v345 = vadd.f32 %v77, %v344
  %v346 = vpop.f32.mrb[0].mxu0
  %v347 = vpop.f32.mrb[0].mxu0
  %v348 = vadd.f32 %v77, %v347
  %v349 = vpop.f32.mrb[0].mxu0
  %350 = vmatprep.mubr.bf16.mxu0 %v159
  %351 = vmatmul.mubr.bf16.gmra.mrb[0].mxu0 %v158
  %v352 = vpop.f32.mrb[0].mxu0
  %v353 = vadd.f32 %v77, %v352
  %v354 = vpop.f32.mrb[0].mxu0
  %v355 = vpop.f32.mrb[0].mxu0
  %v356 = vadd.f32 %v77, %v355
  %v357 = vpop.f32.mrb[0].mxu0
  %358 = vmatprep.mubr.bf16.mxu0 %v161
  %359 = vmatmul.mubr.bf16.gmra.mrb[0].mxu0 %v160
  %v360 = vpop.f32.mrb[0].mxu0
  %v361 = vadd.f32 %v77, %v360
  %v362 = vpop.f32.mrb[0].mxu0
  %v363 = vpop.f32.mrb[0].mxu0
  %v364 = vadd.f32 %v77, %v363
  %v365 = vpop.f32.mrb[0].mxu0
  %366 = vmatprep.mubr.bf16.mxu0 %v163
  %367 = vmatmul.mubr.bf16.gmra.mrb[0].mxu0 %v162
  %v368 = vpop.f32.mrb[0].mxu0
  %v369 = vadd.f32 %v77, %v368
  %v370 = vpop.f32.mrb[0].mxu0
  %v371 = vpop.f32.mrb[0].mxu0
  %v372 = vadd.f32 %v77, %v371
  %v373 = vpop.f32.mrb[0].mxu0
  %374 = vmatprep.mubr.bf16.mxu0 %v165
  %375 = vmatmul.mubr.bf16.gmra.mrb[0].mxu0 %v164
  %v376 = vpop.f32.mrb[0].mxu0
  %v377 = vadd.f32 %v77, %v376
  %v378 = vpop.f32.mrb[0].mxu0
  %v379 = vpop.f32.mrb[0].mxu0
  %v380 = vadd.f32 %v77, %v379
  %v381 = vpop.f32.mrb[0].mxu0
  %382 = vmatprep.mubr.bf16.mxu0 %v167
  %383 = vmatmul.mubr.bf16.gmra.mrb[0].mxu0 %v166
  %v384 = vpop.f32.mrb[0].mxu0
  %v385 = vadd.f32 %v77, %v384
  %v386 = vpop.f32.mrb[0].mxu0
  %v387 = vpop.f32.mrb[0].mxu0
  %v388 = vadd.f32 %v77, %v387
  %v389 = vpop.f32.mrb[0].mxu0
  %390 = vmatprep.mubr.bf16.mxu0 %v169
  %391 = vmatmul.mubr.bf16.gmra.mrb[0].mxu0 %v168
  %v392 = vpop.f32.mrb[0].mxu0
  %v393 = vadd.f32 %v77, %v392
  %v394 = vpop.f32.mrb[0].mxu0
  %v395 = vpop.f32.mrb[0].mxu0
  %v396 = vadd.f32 %v77, %v395
  %v397 = vpop.f32.mrb[0].mxu0
  %398 = vmatprep.mubr.bf16.mxu0 %v171
  %399 = vmatmul.mubr.bf16.gmra.mrb[0].mxu0 %v170
  %v400 = vpop.f32.mrb[0].mxu0
  %v401 = vadd.f32 %v77, %v400
  %v402 = vpop.f32.mrb[0].mxu0
  %v403 = vpop.f32.mrb[0].mxu0
  %v404 = vadd.f32 %v77, %v403
  %v405 = vpop.f32.mrb[0].mxu0
  %406 = vmatprep.mubr.bf16.mxu0 %v173
  %407 = vmatmul.mubr.bf16.gmra.mrb[0].mxu0 %v172
  %v408 = vpop.f32.mrb[0].mxu0
  %v409 = vadd.f32 %v77, %v408
  %v410 = vpop.f32.mrb[0].mxu0
  %v411 = vpop.f32.mrb[0].mxu0
  %v412 = vadd.f32 %v77, %v411
  %v413 = vpop.f32.mrb[0].mxu0
  %414 = vmatprep.mubr.bf16.mxu0 %v175
  %415 = vmatmul.mubr.bf16.gmra.mrb[0].mxu0 %v174
  %v416 = vpop.f32.mrb[0].mxu0
  %v417 = vadd.f32 %v77, %v416
  %v418 = vpop.f32.mrb[0].mxu0
  %v419 = vpop.f32.mrb[0].mxu0
  %v420 = vadd.f32 %v77, %v419
  %v421 = vpop.f32.mrb[0].mxu0
  %422 = vmatprep.mubr.bf16.mxu0 %v177
  %423 = vmatmul.mubr.bf16.gmra.mrb[0].mxu0 %v176
  %v424 = vpop.f32.mrb[0].mxu0
  %v425 = vadd.f32 %v77, %v424
  %v426 = vpop.f32.mrb[0].mxu0
  %v427 = vpop.f32.mrb[0].mxu0
  %v428 = vadd.f32 %v77, %v427
  %v429 = vpop.f32.mrb[0].mxu0
  %430 = vmatprep.mubr.bf16.mxu0 %v179
  %431 = vmatmul.mubr.bf16.gmra.mrb[0].mxu0 %v178
  %v432 = vpop.f32.mrb[0].mxu0
  %v433 = vadd.f32 %v77, %v432
  %v434 = vpop.f32.mrb[0].mxu0
  %v435 = vpop.f32.mrb[0].mxu0
  %v436 = vpop.f32.mrb[0].mxu0
  %437 = vdwg.mxu0
  %v438 = vmax.f32 %v337, 0.0
  %v439 = vmax.f32 %v340, 0.0
  %v440 = vmax.f32 %v345, 0.0
  %v441 = vmax.f32 %v348, 0.0
  %v442 = vmax.f32 %v353, 0.0
  %v443 = vmax.f32 %v356, 0.0
  %v444 = vmax.f32 %v361, 0.0
  %v445 = vmax.f32 %v364, 0.0
  %v446 = vmax.f32 %v369, 0.0
  %v447 = vmax.f32 %v372, 0.0
  %v448 = vmax.f32 %v377, 0.0
  %v449 = vmax.f32 %v380, 0.0
  %v450 = vmax.f32 %v385, 0.0
  %v451 = vmax.f32 %v388, 0.0
  %v452 = vmax.f32 %v393, 0.0
  %v453 = vmax.f32 %v396, 0.0
  %v454 = vmax.f32 %v401, 0.0
  %v455 = vmax.f32 %v404, 0.0
  %v456 = vmax.f32 %v409, 0.0
  %v457 = vmax.f32 %v412, 0.0
  %v458 = vmax.f32 %v417, 0.0
  %v459 = vmax.f32 %v420, 0.0
  %v460 = vmax.f32 %v425, 0.0
  %v461 = vmax.f32 %v428, 0.0
  %v462 = vmax.f32 %v433, 0.0
  %463 = vst [vmem:[%s3] sm:$0xff] %v438
  %464 = vst [vmem:[%s3 + $0x8] sm:$0xff] %v439
  %465 = vst [vmem:[%s3 + $0x10] sm:$0xff] %v440
  %466 = vst [vmem:[%s3 + $0x18] sm:$0xff] %v441
  %467 = vst [vmem:[%s3 + $0x20] sm:$0xff] %v442
  %468 = vst [vmem:[%s3 + $0x28] sm:$0xff] %v443
  %469 = vst [vmem:[%s3 + $0x30] sm:$0xff] %v444
  %470 = vst [vmem:[%s3 + $0x38] sm:$0xff] %v445
  %471 = vst [vmem:[%s3 + $0x40] sm:$0xff] %v446
  %472 = vst [vmem:[%s3 + $0x48] sm:$0xff] %v447
  %473 = vst [vmem:[%s3 + $0x50] sm:$0xff] %v448
  %474 = vst [vmem:[%s3 + $0x58] sm:$0xff] %v449
  %475 = vst [vmem:[%s3 + $0x60] sm:$0xff] %v450
  %476 = vst [vmem:[%s3 + $0x68] sm:$0xff] %v451
  %477 = vst [vmem:[%s3 + $0x70] sm:$0xff] %v452
  %478 = vst [vmem:[%s3 + $0x78] sm:$0xff] %v453
  %479 = vst [vmem:[%s3 + $0x80] sm:$0xff] %v454
  %480 = vst [vmem:[%s3 + $0x88] sm:$0xff] %v455
  %481 = vst [vmem:[%s3 + $0x90] sm:$0xff] %v456
  %482 = vst [vmem:[%s3 + $0x98] sm:$0xff] %v457
  %483 = vst [vmem:[%s3 + $0xa0] sm:$0xff] %v458
  %484 = vst [vmem:[%s3 + $0xa8] sm:$0xff] %v459
  %485 = vst [vmem:[%s3 + $0xb0] sm:$0xff] %v460
  %486 = vst [vmem:[%s3 + $0xb8] sm:$0xff] %v461
  %487 = vst [vmem:[%s3 + $0xc0] sm:$0xff] %v462
  // Predicated region
  $region14: #{net_cnn_forward.4} parent=0 // pred_check
    _
  $region15: #{net_cnn_forward.4} parent=0 // pred_check_branch
    %489 = sbr.rel (0) target = $region17
  $region16: #{net_cnn_forward.4} parent=0 // pred_region
    _
  $region17: #{net_cnn_forward.4} parent=0 // pred_fallthru
    _
  // Predicated region
  $region18: #{net_cnn_forward.4} parent=0 // pred_check
    _
  $region19: #{net_cnn_forward.4} parent=0 // pred_check_branch
    %491 = sbr.rel (0) target = $region21
  $region20: #{net_cnn_forward.4} parent=0 // pred_region
    _
  $region21: #{net_cnn_forward.4} parent=0 // pred_fallthru
    _

// kernel: net_cnn_forward.5
$region0: #{net_cnn_forward.5}
  #allocation0 [shape = 'u32[]', space=smem, size = 0x4, offset = 0x4, fixed_abs, tag = 'smem constant byte address 0x4 - core index']
  #allocation1 [shape = 'u32[144,128]{1,0:T(1,128)}', space=vmem, size = 0x12000, scoped, tag = 'internal scratch']
  %s0 = inlined_call_operand.vmem [shape: bf16[8,512], index: 0, kind: input, shape index: {}]
  %s1 = inlined_call_operand.vmem [shape: bf16[512,128], index: 1, kind: input, shape index: {}]
  %s2 = inlined_call_operand.vmem [shape: f32[1,128], index: 2, kind: input, shape index: {}]
  %s3 = inlined_call_operand.vmem [shape: bf16[128,128], index: 3, kind: input, shape index: {}]
  %s4 = inlined_call_operand.vmem [shape: f32[1,128], index: 4, kind: input, shape index: {}]
  %s5 = inlined_call_operand.vmem [shape: bf16[128,128], index: 5, kind: input, shape index: {}]
  %s6 = inlined_call_operand.vmem [shape: f32[1,128], index: 6, kind: input, shape index: {}]
  %s7 = inlined_call_operand.vmem [shape: f32[8,128], index: 7, kind: output, shape index: {}]
  %s8 = sld [smem:[#allocation0]]
  $region38: #{net_cnn_forward.5} parent=0
    _
  %s10 = ssub.s32 1, %s8
  %s11 = scalar_select 0, %s10, %s8
  // Predicated region
  $region2: #{net_cnn_forward.5} parent=0 // pred_check
    _
  $region3: #{net_cnn_forward.5} parent=0 // pred_check_branch
    %13 = sbr.rel (0) target = $region5
  $region4: #{net_cnn_forward.5} parent=0 // pred_region
    _
  $region5: #{net_cnn_forward.5} parent=0 // pred_fallthru
    _
  // Predicated region
  $region6: #{net_cnn_forward.5} parent=0 // pred_check
    _
  $region7: #{net_cnn_forward.5} parent=0 // pred_check_branch
    %15 = sbr.rel (0) target = $region9
  $region8: #{net_cnn_forward.5} parent=0 // pred_region
    _
  $region9: #{net_cnn_forward.5} parent=0 // pred_fallthru
    _
  // Predicated region
  $region10: #{net_cnn_forward.5} parent=0 // pred_check
    _
  $region11: #{net_cnn_forward.5} parent=0 // pred_check_branch
    %17 = sbr.rel (0) target = $region13
  $region12: #{net_cnn_forward.5} parent=0 // pred_region
    _
  $region13: #{net_cnn_forward.5} parent=0 // pred_fallthru
    _
  // Predicated region
  $region14: #{net_cnn_forward.5} parent=0 // pred_check
    _
  $region15: #{net_cnn_forward.5} parent=0 // pred_check_branch
    %19 = sbr.rel (0) target = $region17
  $region16: #{net_cnn_forward.5} parent=0 // pred_region
    _
  $region17: #{net_cnn_forward.5} parent=0 // pred_fallthru
    _
  // Predicated region
  $region18: #{net_cnn_forward.5} parent=0 // pred_check
    _
  $region19: #{net_cnn_forward.5} parent=0 // pred_check_branch
    %21 = sbr.rel (0) target = $region21
  $region20: #{net_cnn_forward.5} parent=0 // pred_region
    _
  $region21: #{net_cnn_forward.5} parent=0 // pred_fallthru
    _
  // Predicated region
  $region22: #{net_cnn_forward.5} parent=0 // pred_check
    _
  $region23: #{net_cnn_forward.5} parent=0 // pred_check_branch
    %23 = sbr.rel (0) target = $region25
  $region24: #{net_cnn_forward.5} parent=0 // pred_region
    _
  $region25: #{net_cnn_forward.5} parent=0 // pred_fallthru
    _
  // Predicated region
  $region26: #{net_cnn_forward.5} parent=0 // pred_check
    _
  $region27: #{net_cnn_forward.5} parent=0 // pred_check_branch
    %25 = sbr.rel (0) target = $region29
  $region28: #{net_cnn_forward.5} parent=0 // pred_region
    _
  $region29: #{net_cnn_forward.5} parent=0 // pred_fallthru
    _
  %v27 = vld [vmem:[%s0] sm:$0xff]
  %v28 = vld [vmem:[%s0 + $0x8] sm:$0xff]
  %v29 = vld [vmem:[%s1] sm:$0xf]
  %v30 = vld [vmem:[%s1 + $0x4] sm:$0xf]
  %v31 = vld [vmem:[%s1 + $0x8] sm:$0xf]
  %v32 = vld [vmem:[%s1 + $0xc] sm:$0xf]
  %v33 = vld [vmem:[%s1 + $0x10] sm:$0xf]
  %v34 = vld [vmem:[%s1 + $0x14] sm:$0xf]
  %v35 = vld [vmem:[%s1 + $0x18] sm:$0xf]
  %v36 = vld [vmem:[%s1 + $0x1c] sm:$0xf]
  %v37 = vld [vmem:[%s1 + $0x20] sm:$0xf]
  %v38 = vld [vmem:[%s1 + $0x24] sm:$0xf]
  %v39 = vld [vmem:[%s1 + $0x28] sm:$0xf]
  %v40 = vld [vmem:[%s1 + $0x2c] sm:$0xf]
  %v41 = vld [vmem:[%s1 + $0x30] sm:$0xf]
  %v42 = vld [vmem:[%s1 + $0x34] sm:$0xf]
  %v43 = vld [vmem:[%s1 + $0x38] sm:$0xf]
  %v44 = vld [vmem:[%s1 + $0x3c] sm:$0xf]
  %v45 = vld [vmem:[%s1 + $0x40] sm:$0xf]
  %v46 = vld [vmem:[%s1 + $0x44] sm:$0xf]
  %v47 = vld [vmem:[%s1 + $0x48] sm:$0xf]
  %v48 = vld [vmem:[%s1 + $0x4c] sm:$0xf]
  %v49 = vld [vmem:[%s1 + $0x50] sm:$0xf]
  %v50 = vld [vmem:[%s1 + $0x54] sm:$0xf]
  %v51 = vld [vmem:[%s1 + $0x58] sm:$0xf]
  %v52 = vld [vmem:[%s1 + $0x5c] sm:$0xf]
  %v53 = vld [vmem:[%s1 + $0x60] sm:$0xf]
  %v54 = vld [vmem:[%s1 + $0x64] sm:$0xf]
  %v55 = vld [vmem:[%s1 + $0x68] sm:$0xf]
  %v56 = vld [vmem:[%s1 + $0x6c] sm:$0xf]
  %v57 = vld [vmem:[%s1 + $0x70] sm:$0xf]
  %v58 = vld [vmem:[%s1 + $0x74] sm:$0xf]
  %v59 = vld [vmem:[%s1 + $0x78] sm:$0xf]
  %v60 = vld [vmem:[%s1 + $0x7c] sm:$0xf]
  %v61 = vld [vmem:[%s1 + $0x80] sm:$0xf]
  %v62 = vld [vmem:[%s1 + $0x84] sm:$0xf]
  %v63 = vld [vmem:[%s1 + $0x88] sm:$0xf]
  %v64 = vld [vmem:[%s1 + $0x8c] sm:$0xf]
  %v65 = vld [vmem:[%s1 + $0x90] sm:$0xf]
  %v66 = vld [vmem:[%s1 + $0x94] sm:$0xf]
  %v67 = vld [vmem:[%s1 + $0x98] sm:$0xf]
  %v68 = vld [vmem:[%s1 + $0x9c] sm:$0xf]
  %v69 = vld [vmem:[%s1 + $0xa0] sm:$0xf]
  %v70 = vld [vmem:[%s1 + $0xa4] sm:$0xf]
  %v71 = vld [vmem:[%s1 + $0xa8] sm:$0xf]
  %v72 = vld [vmem:[%s1 + $0xac] sm:$0xf]
  %v73 = vld [vmem:[%s1 + $0xb0] sm:$0xf]
  %v74 = vld [vmem:[%s1 + $0xb4] sm:$0xf]
  %v75 = vld [vmem:[%s1 + $0xb8] sm:$0xf]
  %v76 = vld [vmem:[%s1 + $0xbc] sm:$0xf]
  %v77 = vld [vmem:[%s1 + $0xc0] sm:$0xf]
  %v78 = vld [vmem:[%s1 + $0xc4] sm:$0xf]
  %v79 = vld [vmem:[%s1 + $0xc8] sm:$0xf]
  %v80 = vld [vmem:[%s1 + $0xcc] sm:$0xf]
  %v81 = vld [vmem:[%s1 + $0xd0] sm:$0xf]
  %v82 = vld [vmem:[%s1 + $0xd4] sm:$0xf]
  %v83 = vld [vmem:[%s1 + $0xd8] sm:$0xf]
  %v84 = vld [vmem:[%s1 + $0xdc] sm:$0xf]
  %v85 = vld [vmem:[%s1 + $0xe0] sm:$0xf]
  %v86 = vld [vmem:[%s1 + $0xe4] sm:$0xf]
  %v87 = vld [vmem:[%s1 + $0xe8] sm:$0xf]
  %v88 = vld [vmem:[%s1 + $0xec] sm:$0xf]
  %v89 = vld [vmem:[%s1 + $0xf0] sm:$0xf]
  %v90 = vld [vmem:[%s1 + $0xf4] sm:$0xf]
  %v91 = vld [vmem:[%s1 + $0xf8] sm:$0xf]
  %v92 = vld [vmem:[%s1 + $0xfc] sm:$0xf]
  %v93 = vld [vmem:[%s2] sm:$0x1]
  %v95 = vlaneseq
  %v96 = vshrl.u32 %v95, 7
  %v97 = vsub.s32 0, %v96
  %v98 = vrot.slane %v93, %v97
  %v102 = vunpack.c.l.b16 %v27
  %v103 = vunpack.c.h.b16 %v27
  %v104 = vunpack.c.l.b16 %v28
  %v105 = vunpack.c.h.b16 %v28
  %v106 = vpack.c.b16 %v102, %v102
  %v107 = vpack.c.b16 %v103, %v103
  %v108 = vpack.c.b16 %v104, %v104
  %v109 = vpack.c.b16 %v105, %v105
  %v178 = vunpack.c.l.b16 %v29
  %v179 = vunpack.c.l.b16 %v30
  %v180 = vunpack.c.l.b16 %v31
  %v181 = vunpack.c.l.b16 %v32
  %v182 = vunpack.c.l.b16 %v33
  %v183 = vunpack.c.l.b16 %v34
  %v184 = vunpack.c.l.b16 %v35
  %v185 = vunpack.c.l.b16 %v36
  %v186 = vunpack.c.l.b16 %v37
  %v187 = vunpack.c.l.b16 %v38
  %v188 = vunpack.c.l.b16 %v39
  %v189 = vunpack.c.l.b16 %v40
  %v190 = vunpack.c.l.b16 %v41
  %v191 = vunpack.c.l.b16 %v42
  %v192 = vunpack.c.l.b16 %v43
  %v193 = vunpack.c.l.b16 %v44
  %v194 = vunpack.c.l.b16 %v45
  %v195 = vunpack.c.l.b16 %v46
  %v196 = vunpack.c.l.b16 %v47
  %v197 = vunpack.c.l.b16 %v48
  %v198 = vunpack.c.l.b16 %v49
  %v199 = vunpack.c.l.b16 %v50
  %v200 = vunpack.c.l.b16 %v51
  %v201 = vunpack.c.l.b16 %v52
  %v202 = vunpack.c.l.b16 %v53
  %v203 = vunpack.c.l.b16 %v54
  %v204 = vunpack.c.l.b16 %v55
  %v205 = vunpack.c.l.b16 %v56
  %v206 = vunpack.c.l.b16 %v57
  %v207 = vunpack.c.l.b16 %v58
  %v208 = vunpack.c.l.b16 %v59
  %v209 = vunpack.c.l.b16 %v60
  %v210 = vunpack.c.l.b16 %v61
  %v211 = vunpack.c.l.b16 %v62
  %v212 = vunpack.c.l.b16 %v63
  %v213 = vunpack.c.l.b16 %v64
  %v214 = vunpack.c.l.b16 %v65
  %v215 = vunpack.c.l.b16 %v66
  %v216 = vunpack.c.l.b16 %v67
  %v217 = vunpack.c.l.b16 %v68
  %v218 = vunpack.c.l.b16 %v69
  %v219 = vunpack.c.l.b16 %v70
  %v220 = vunpack.c.l.b16 %v71
  %v221 = vunpack.c.l.b16 %v72
  %v222 = vunpack.c.l.b16 %v73
  %v223 = vunpack.c.l.b16 %v74
  %v224 = vunpack.c.l.b16 %v75
  %v225 = vunpack.c.l.b16 %v76
  %v226 = vunpack.c.l.b16 %v77
  %v227 = vunpack.c.l.b16 %v78
  %v228 = vunpack.c.l.b16 %v79
  %v229 = vunpack.c.l.b16 %v80
  %v230 = vunpack.c.l.b16 %v81
  %v231 = vunpack.c.l.b16 %v82
  %v232 = vunpack.c.l.b16 %v83
  %v233 = vunpack.c.l.b16 %v84
  %v234 = vunpack.c.l.b16 %v85
  %v235 = vunpack.c.l.b16 %v86
  %v236 = vunpack.c.l.b16 %v87
  %v237 = vunpack.c.l.b16 %v88
  %v238 = vunpack.c.l.b16 %v89
  %v239 = vunpack.c.l.b16 %v90
  %v240 = vunpack.c.l.b16 %v91
  %v241 = vunpack.c.l.b16 %v92
  %v242 = vpack.c.b16 %v179, %v178
  %v243 = vpack.c.b16 %v181, %v180
  %v244 = vpack.c.b16 %v183, %v182
  %v245 = vpack.c.b16 %v185, %v184
  %v246 = vpack.c.b16 %v187, %v186
  %v247 = vpack.c.b16 %v189, %v188
  %v248 = vpack.c.b16 %v191, %v190
  %v249 = vpack.c.b16 %v193, %v192
  %v250 = vpack.c.b16 %v195, %v194
  %v251 = vpack.c.b16 %v197, %v196
  %v252 = vpack.c.b16 %v199, %v198
  %v253 = vpack.c.b16 %v201, %v200
  %v254 = vpack.c.b16 %v203, %v202
  %v255 = vpack.c.b16 %v205, %v204
  %v256 = vpack.c.b16 %v207, %v206
  %v257 = vpack.c.b16 %v209, %v208
  %v258 = vpack.c.b16 %v211, %v210
  %v259 = vpack.c.b16 %v213, %v212
  %v260 = vpack.c.b16 %v215, %v214
  %v261 = vpack.c.b16 %v217, %v216
  %v262 = vpack.c.b16 %v219, %v218
  %v263 = vpack.c.b16 %v221, %v220
  %v264 = vpack.c.b16 %v223, %v222
  %v265 = vpack.c.b16 %v225, %v224
  %v266 = vpack.c.b16 %v227, %v226
  %v267 = vpack.c.b16 %v229, %v228
  %v268 = vpack.c.b16 %v231, %v230
  %v269 = vpack.c.b16 %v233, %v232
  %v270 = vpack.c.b16 %v235, %v234
  %v271 = vpack.c.b16 %v237, %v236
  %v272 = vpack.c.b16 %v239, %v238
  %v273 = vpack.c.b16 %v241, %v240
  %306 = vmatprep.subr.bf16.mxu0 0
  %307 = vmatpush1.bf16.msra.mxu0 %v242
  %308 = vmatprep.subr.bf16.mxu0 0
  %309 = vmatpush1.bf16.msra.mxu0 %v243
  %310 = vmatprep.subr.bf16.mxu0 0
  %311 = vmatpush1.bf16.msra.mxu0 %v244
  %312 = vmatprep.subr.bf16.mxu0 0
  %313 = vmatpush1.bf16.msra.mxu0 %v245
  %314 = vmatprep.subr.bf16.mxu0 0
  %315 = vmatpush1.bf16.msra.mxu0 %v246
  %316 = vmatprep.subr.bf16.mxu0 0
  %317 = vmatpush1.bf16.msra.mxu0 %v247
  %318 = vmatprep.subr.bf16.mxu0 0
  %319 = vmatpush1.bf16.msra.mxu0 %v248
  %320 = vmatprep.subr.bf16.mxu0 0
  %321 = vmatpush1.bf16.msra.mxu0 %v249
  %322 = vmatprep.subr.bf16.mxu0 0
  %323 = vmatpush1.bf16.msra.mxu0 %v250
  %324 = vmatprep.subr.bf16.mxu0 0
  %325 = vmatpush1.bf16.msra.mxu0 %v251
  %326 = vmatprep.subr.bf16.mxu0 0
  %327 = vmatpush1.bf16.msra.mxu0 %v252
  %328 = vmatprep.subr.bf16.mxu0 0
  %329 = vmatpush1.bf16.msra.mxu0 %v253
  %330 = vmatprep.subr.bf16.mxu0 0
  %331 = vmatpush1.bf16.msra.mxu0 %v254
  %332 = vmatprep.subr.bf16.mxu0 0
  %333 = vmatpush1.bf16.msra.mxu0 %v255
  %334 = vmatprep.subr.bf16.mxu0 0
  %335 = vmatpush1.bf16.msra.mxu0 %v256
  %336 = vmatprep.subr.bf16.mxu0 0
  %337 = vmatpush1.bf16.msra.mxu0 %v257
  %338 = vmatprep.mubr.bf16.mxu0 %v107
  %339 = vmatmul.mubr.bf16.gmra.mrb[0].mxu0 %v106
  %v340 = vpop.f32.mrb[0].mxu0
  %v341 = vadd.f32 %v98, %v340
  %v342 = vpop.f32.mrb[0].mxu0
  %v343 = vpop.f32.mrb[0].mxu0
  %v344 = vpop.f32.mrb[0].mxu0
  %345 = vdwg.mxu0
  %346 = vmatprep.subr.bf16.mxu0 0
  %347 = vmatpush1.bf16.msra.mxu0 %v258
  %348 = vmatprep.subr.bf16.mxu0 0
  %349 = vmatpush1.bf16.msra.mxu0 %v259
  %350 = vmatprep.subr.bf16.mxu0 0
  %351 = vmatpush1.bf16.msra.mxu0 %v260
  %352 = vmatprep.subr.bf16.mxu0 0
  %353 = vmatpush1.bf16.msra.mxu0 %v261
  %354 = vmatprep.subr.bf16.mxu0 0
  %355 = vmatpush1.bf16.msra.mxu0 %v262
  %356 = vmatprep.subr.bf16.mxu0 0
  %357 = vmatpush1.bf16.msra.mxu0 %v263
  %358 = vmatprep.subr.bf16.mxu0 0
  %359 = vmatpush1.bf16.msra.mxu0 %v264
  %360 = vmatprep.subr.bf16.mxu0 0
  %361 = vmatpush1.bf16.msra.mxu0 %v265
  %362 = vmatprep.subr.bf16.mxu0 0
  %363 = vmatpush1.bf16.msra.mxu0 %v266
  %364 = vmatprep.subr.bf16.mxu0 0
  %365 = vmatpush1.bf16.msra.mxu0 %v267
  %366 = vmatprep.subr.bf16.mxu0 0
  %367 = vmatpush1.bf16.msra.mxu0 %v268
  %368 = vmatprep.subr.bf16.mxu0 0
  %369 = vmatpush1.bf16.msra.mxu0 %v269
  %370 = vmatprep.subr.bf16.mxu0 0
  %371 = vmatpush1.bf16.msra.mxu0 %v270
  %372 = vmatprep.subr.bf16.mxu0 0
  %373 = vmatpush1.bf16.msra.mxu0 %v271
  %374 = vmatprep.subr.bf16.mxu0 0
  %375 = vmatpush1.bf16.msra.mxu0 %v272
  %376 = vmatprep.subr.bf16.mxu0 0
  %377 = vmatpush1.bf16.msra.mxu0 %v273
  %378 = vmatprep.mubr.bf16.mxu0 %v109
  %379 = vmatmul.mubr.bf16.gmra.mrb[0].mxu0 %v108
  %v380 = vpop.f32.mrb[0].mxu0
  %v381 = vadd.f32 %v341, %v380
  %v382 = vpop.f32.mrb[0].mxu0
  %v383 = vpop.f32.mrb[0].mxu0
  %v384 = vpop.f32.mrb[0].mxu0
  %385 = vdwg.mxu0
  %v386 = vmax.f32 %v381, 0.0
  %v387 = vpack.c.bf16 %v386, %v386
  %v388 = vld [vmem:[%s3] sm:$0xf]
  %v389 = vld [vmem:[%s3 + $0x4] sm:$0xf]
  %v390 = vld [vmem:[%s3 + $0x8] sm:$0xf]
  %v391 = vld [vmem:[%s3 + $0xc] sm:$0xf]
  %v392 = vld [vmem:[%s3 + $0x10] sm:$0xf]
  %v393 = vld [vmem:[%s3 + $0x14] sm:$0xf]
  %v394 = vld [vmem:[%s3 + $0x18] sm:$0xf]
  %v395 = vld [vmem:[%s3 + $0x1c] sm:$0xf]
  %v396 = vld [vmem:[%s3 + $0x20] sm:$0xf]
  %v397 = vld [vmem:[%s3 + $0x24] sm:$0xf]
  %v398 = vld [vmem:[%s3 + $0x28] sm:$0xf]
  %v399 = vld [vmem:[%s3 + $0x2c] sm:$0xf]
  %v400 = vld [vmem:[%s3 + $0x30] sm:$0xf]
  %v401 = vld [vmem:[%s3 + $0x34] sm:$0xf]
  %v402 = vld [vmem:[%s3 + $0x38] sm:$0xf]
  %v403 = vld [vmem:[%s3 + $0x3c] sm:$0xf]
  %v404 = vld [vmem:[%s4] sm:$0x1]
  %v406 = vlaneseq
  %v407 = vshrl.u32 %v406, 7
  %v408 = vsub.s32 0, %v407
  %v409 = vrot.slane %v404, %v408
  %v427 = vunpack.c.l.b16 %v388
  %v428 = vunpack.c.l.b16 %v389
  %v429 = vunpack.c.l.b16 %v390
  %v430 = vunpack.c.l.b16 %v391
  %v431 = vunpack.c.l.b16 %v392
  %v432 = vunpack.c.l.b16 %v393
  %v433 = vunpack.c.l.b16 %v394
  %v434 = vunpack.c.l.b16 %v395
  %v435 = vunpack.c.l.b16 %v396
  %v436 = vunpack.c.l.b16 %v397
  %v437 = vunpack.c.l.b16 %v398
  %v438 = vunpack.c.l.b16 %v399
  %v439 = vunpack.c.l.b16 %v400
  %v440 = vunpack.c.l.b16 %v401
  %v441 = vunpack.c.l.b16 %v402
  %v442 = vunpack.c.l.b16 %v403
  %v443 = vpack.c.b16 %v428, %v427
  %v444 = vpack.c.b16 %v430, %v429
  %v445 = vpack.c.b16 %v432, %v431
  %v446 = vpack.c.b16 %v434, %v433
  %v447 = vpack.c.b16 %v436, %v435
  %v448 = vpack.c.b16 %v438, %v437
  %v449 = vpack.c.b16 %v440, %v439
  %v450 = vpack.c.b16 %v442, %v441
  %459 = vmatprep.subr.bf16.mxu0 0
  %460 = vmatpush1.bf16.msra.mxu0 %v443
  %461 = vmatprep.subr.bf16.mxu0 0
  %462 = vmatpush1.bf16.msra.mxu0 %v444
  %463 = vmatprep.subr.bf16.mxu0 0
  %464 = vmatpush1.bf16.msra.mxu0 %v445
  %465 = vmatprep.subr.bf16.mxu0 0
  %466 = vmatpush1.bf16.msra.mxu0 %v446
  %467 = vmatprep.subr.bf16.mxu0 0
  %468 = vmatpush1.bf16.msra.mxu0 %v447
  %469 = vmatprep.subr.bf16.mxu0 0
  %470 = vmatpush1.bf16.msra.mxu0 %v448
  %471 = vmatprep.subr.bf16.mxu0 0
  %472 = vmatpush1.bf16.msra.mxu0 %v449
  %473 = vmatprep.subr.bf16.mxu0 0
  %474 = vmatpush1.bf16.msra.mxu0 %v450
  %475 = vmatprep.subr.bf16.mxu0 0
  %476 = vmatpush1.bf16.msra.mxu0 0
  %477 = vmatprep.subr.bf16.mxu0 0
  %478 = vmatpush1.bf16.msra.mxu0 0
  %479 = vmatprep.subr.bf16.mxu0 0
  %480 = vmatpush1.bf16.msra.mxu0 0
  %481 = vmatprep.subr.bf16.mxu0 0
  %482 = vmatpush1.bf16.msra.mxu0 0
  %483 = vmatprep.subr.bf16.mxu0 0
  %484 = vmatpush1.bf16.msra.mxu0 0
  %485 = vmatprep.subr.bf16.mxu0 0
  %486 = vmatpush1.bf16.msra.mxu0 0
  %487 = vmatprep.subr.bf16.mxu0 0
  %488 = vmatpush1.bf16.msra.mxu0 0
  %489 = vmatprep.subr.bf16.mxu0 0
  %490 = vmatpush1.bf16.msra.mxu0 0
  %491 = vmatprep.mubr.bf16.mxu0 0
  %492 = vmatmul.mubr.bf16.gmra.mrb[0].mxu0 %v387
  %v493 = vpop.f32.mrb[0].mxu0
  %v494 = vadd.f32 %v409, %v493
  %v495 = vpop.f32.mrb[0].mxu0
  %v496 = vpop.f32.mrb[0].mxu0
  %v497 = vpop.f32.mrb[0].mxu0
  %498 = vdwg.mxu0
  %v499 = vmax.f32 %v494, 0.0
  %v500 = vpack.c.bf16 %v499, %v499
  %v501 = vld [vmem:[%s5] sm:$0xf]
  %v502 = vld [vmem:[%s5 + $0x4] sm:$0xf]
  %v503 = vld [vmem:[%s5 + $0x8] sm:$0xf]
  %v504 = vld [vmem:[%s5 + $0xc] sm:$0xf]
  %v505 = vld [vmem:[%s5 + $0x10] sm:$0xf]
  %v506 = vld [vmem:[%s5 + $0x14] sm:$0xf]
  %v507 = vld [vmem:[%s5 + $0x18] sm:$0xf]
  %v508 = vld [vmem:[%s5 + $0x1c] sm:$0xf]
  %v509 = vld [vmem:[%s5 + $0x20] sm:$0xf]
  %v510 = vld [vmem:[%s5 + $0x24] sm:$0xf]
  %v511 = vld [vmem:[%s5 + $0x28] sm:$0xf]
  %v512 = vld [vmem:[%s5 + $0x2c] sm:$0xf]
  %v513 = vld [vmem:[%s5 + $0x30] sm:$0xf]
  %v514 = vld [vmem:[%s5 + $0x34] sm:$0xf]
  %v515 = vld [vmem:[%s5 + $0x38] sm:$0xf]
  %v516 = vld [vmem:[%s5 + $0x3c] sm:$0xf]
  %v517 = vld [vmem:[%s6] sm:$0x1]
  %v519 = vlaneseq
  %v520 = vshrl.u32 %v519, 7
  %v521 = vsub.s32 0, %v520
  %v522 = vrot.slane %v517, %v521
  %v540 = vunpack.c.l.b16 %v501
  %v541 = vunpack.c.l.b16 %v502
  %v542 = vunpack.c.l.b16 %v503
  %v543 = vunpack.c.l.b16 %v504
  %v544 = vunpack.c.l.b16 %v505
  %v545 = vunpack.c.l.b16 %v506
  %v546 = vunpack.c.l.b16 %v507
  %v547 = vunpack.c.l.b16 %v508
  %v548 = vunpack.c.l.b16 %v509
  %v549 = vunpack.c.l.b16 %v510
  %v550 = vunpack.c.l.b16 %v511
  %v551 = vunpack.c.l.b16 %v512
  %v552 = vunpack.c.l.b16 %v513
  %v553 = vunpack.c.l.b16 %v514
  %v554 = vunpack.c.l.b16 %v515
  %v555 = vunpack.c.l.b16 %v516
  %v556 = vpack.c.b16 %v541, %v540
  %v557 = vpack.c.b16 %v543, %v542
  %v558 = vpack.c.b16 %v545, %v544
  %v559 = vpack.c.b16 %v547, %v546
  %v560 = vpack.c.b16 %v549, %v548
  %v561 = vpack.c.b16 %v551, %v550
  %v562 = vpack.c.b16 %v553, %v552
  %v563 = vpack.c.b16 %v555, %v554
  %572 = vmatprep.subr.bf16.mxu0 0
  %573 = vmatpush1.bf16.msra.mxu0 %v556
  %574 = vmatprep.subr.bf16.mxu0 0
  %575 = vmatpush1.bf16.msra.mxu0 %v557
  %576 = vmatprep.subr.bf16.mxu0 0
  %577 = vmatpush1.bf16.msra.mxu0 %v558
  %578 = vmatprep.subr.bf16.mxu0 0
  %579 = vmatpush1.bf16.msra.mxu0 %v559
  %580 = vmatprep.subr.bf16.mxu0 0
  %581 = vmatpush1.bf16.msra.mxu0 %v560
  %582 = vmatprep.subr.bf16.mxu0 0
  %583 = vmatpush1.bf16.msra.mxu0 %v561
  %584 = vmatprep.subr.bf16.mxu0 0
  %585 = vmatpush1.bf16.msra.mxu0 %v562
  %586 = vmatprep.subr.bf16.mxu0 0
  %587 = vmatpush1.bf16.msra.mxu0 %v563
  %588 = vmatprep.subr.bf16.mxu0 0
  %589 = vmatpush1.bf16.msra.mxu0 0
  %590 = vmatprep.subr.bf16.mxu0 0
  %591 = vmatpush1.bf16.msra.mxu0 0
  %592 = vmatprep.subr.bf16.mxu0 0
  %593 = vmatpush1.bf16.msra.mxu0 0
  %594 = vmatprep.subr.bf16.mxu0 0
  %595 = vmatpush1.bf16.msra.mxu0 0
  %596 = vmatprep.subr.bf16.mxu0 0
  %597 = vmatpush1.bf16.msra.mxu0 0
  %598 = vmatprep.subr.bf16.mxu0 0
  %599 = vmatpush1.bf16.msra.mxu0 0
  %600 = vmatprep.subr.bf16.mxu0 0
  %601 = vmatpush1.bf16.msra.mxu0 0
  %602 = vmatprep.subr.bf16.mxu0 0
  %603 = vmatpush1.bf16.msra.mxu0 0
  %604 = vmatprep.mubr.bf16.mxu0 0
  %605 = vmatmul.mubr.bf16.gmra.mrb[0].mxu0 %v500
  %v606 = vpop.f32.mrb[0].mxu0
  %v607 = vadd.f32 %v522, %v606
  %v608 = vpop.f32.mrb[0].mxu0
  %v609 = vpop.f32.mrb[0].mxu0
  %v610 = vpop.f32.mrb[0].mxu0
  %611 = vdwg.mxu0
  %612 = vst [vmem:[%s7] sm:$0xff] %v607
  // Predicated region
  $region30: #{net_cnn_forward.5} parent=0 // pred_check
    _
  $region31: #{net_cnn_forward.5} parent=0 // pred_check_branch
    %614 = sbr.rel (0) target = $region33
  $region32: #{net_cnn_forward.5} parent=0 // pred_region
    _
  $region33: #{net_cnn_forward.5} parent=0 // pred_fallthru
    _
  // Predicated region
  $region34: #{net_cnn_forward.5} parent=0 // pred_check
    _
  $region35: #{net_cnn_forward.5} parent=0 // pred_check_branch
    %616 = sbr.rel (0) target = $region37
  $region36: #{net_cnn_forward.5} parent=0 // pred_region
    _
  $region37: #{net_cnn_forward.5} parent=0 // pred_fallthru
    _

</llo_original>
